<compile_context>
chip_gen: v7x
topology: tpu7x:2x2x1
jax: 0.10.0
libtpu: 0.0.40
codegen_flags: <defaults>
</compile_context>

<pallas_src>
import functools

import jax
import jax.numpy as jnp
from jax.experimental import pallas as pl
from jax.experimental.pallas import tpu as pltpu


# ------------------------------ fused kernel --------------------------------

def _fused_lstm_fc_kernel(*refs, num_layers, seq_len, batch_pad, hidden):
    """refs = (x2d, [w_ih_t, w_hh_t, bias] * L, fc_w, fc_b, out_ref, seq_scratch).

    x2d        : (T*Bp, D_in)  time-major flattened padded input (row = t*Bp + b)
    w_ih_t     : (D_in_l, 4H)  transposed input->hidden weights (gate order i,f,g,o)
    w_hh_t     : (H, 4H)       transposed hidden->hidden weights
    bias       : (1, 4H)       b_ih + b_hh
    fc_w       : (1, H)        final Linear weight (PyTorch (out=1, in=H) layout)
    fc_b       : (1, 1)
    out        : (Bp, 128)     lane-dense padded output slab (result broadcast on lanes)
    seq_scratch: (T*Bp, H)     VMEM scratch holding the inter-layer h sequence
    """
    T, B, H, L = seq_len, batch_pad, hidden, num_layers
    x_ref = refs[0]
    fc_w_ref = refs[1 + 3 * L]
    fc_b_ref = refs[2 + 3 * L]
    out_ref = refs[3 + 3 * L]
    seq_ref = refs[4 + 3 * L]

    # Lane mask selecting the `g` gate block (lanes [2H, 3H)).  g lanes get a
    # plain tanh; all other lanes get sigmoid via sigmoid(x) = 0.5*tanh(x/2)+0.5
    # so only ONE full-width transcendental runs per timestep.
    lane = jax.lax.broadcasted_iota(jnp.int32, (B, 4 * H), 1)
    g_lanes = (lane >= 2 * H) & (lane < 3 * H)

    h = jnp.zeros((B, H), jnp.float32)
    for l in range(L):
        w_ih = refs[1 + 3 * l][...]                      # (D_in_l, 4H)
        w_hh = refs[2 + 3 * l][...]                      # (H, 4H)
        bias = refs[3 + 3 * l][...]                      # (1, 4H)

        # Layer input: the padded x for layer 0, else the scratch sequence
        # written by the previous layer.
        x_rows = x_ref[...].astype(jnp.float32) if l == 0 else seq_ref[...]

        # Hoisted input projection: ONE matmul for all timesteps of this layer.
        gx = jnp.dot(x_rows, w_ih, preferred_element_type=jnp.float32) + bias  # (T*Bp, 4H)

        h = jnp.zeros((B, H), jnp.float32)
        c = jnp.zeros((B, H), jnp.float32)
        for t in range(T):                               # fully unrolled: T static & small
            gates = gx[t * B:(t + 1) * B, :] + jnp.dot(
                h, w_hh, preferred_element_type=jnp.float32)          # (B, 4H)
            # One tanh for the whole tile; sigmoid lanes via pre/post affine.
            z = jnp.where(g_lanes, gates, 0.5 * gates)
            y = jnp.tanh(z)
            act = jnp.where(g_lanes, y, 0.5 * y + 0.5)
            i_g = act[:, 0 * H:1 * H]
            f_g = act[:, 1 * H:2 * H]
            g_g = act[:, 2 * H:3 * H]
            o_g = act[:, 3 * H:4 * H]
            c = f_g * c + i_g * g_g
            h = o_g * jnp.tanh(c)
            if l < L - 1:
                # Stage this step's h for the next layer (cheap aligned vst's;
                # keeps vreg pressure bounded instead of a big concat).
                seq_ref[t * B:(t + 1) * B, :] = h

    # Final Linear(hidden, 1) on the last timestep of the top layer.
    res = jnp.sum(h * fc_w_ref[...], axis=1, keepdims=True) + fc_b_ref[...]   # (Bp, 1)
    out_ref[...] = jnp.broadcast_to(res, out_ref.shape).astype(out_ref.dtype)


# -------------------------------- wrapper ------------------------------------

def _full_block(shape):
    """Whole-array VMEM block (no grid)."""
    return pl.BlockSpec(shape, lambda: (0,) * len(shape))


@jax.jit
def lstm_model_forward(x, params):
    """Full forward pass mirroring the PyTorch module.

    x: (B, T, input_size)  -> returns (B, 1)
    """
    B, T, D_in = x.shape
    layers = params["lstm_layers"]
    num_layers = len(layers)
    H = layers[0]["whh_t"].shape[0]

    # Pad batch (sublane dim) up to a multiple of 8 so all recurrent tiles are
    # whole vregs.  Padded rows run through the recurrence independently and
    # are sliced off at the end.
    B_pad = max(8, ((B + 7) // 8) * 8)

    # Time-major, padded, flattened rows: row = t*B_pad + b.
    x_tm = jnp.transpose(x, (1, 0, 2)).astype(jnp.float32)        # (T, B, D)
    x_tm = jnp.pad(x_tm, ((0, 0), (0, B_pad - B), (0, 0)))        # (T, Bp, D)
    x_2d = x_tm.reshape(T * B_pad, D_in)

    inputs = [x_2d]
    in_specs = [_full_block((T * B_pad, D_in))]
    for layer in layers:
        inputs += [layer["wih_t"], layer["whh_t"], layer["bias"]]
        in_specs += [
            _full_block(layer["wih_t"].shape),
            _full_block((H, 4 * H)),
            _full_block((1, 4 * H)),
        ]
    inputs += [params["fc_w"], params["fc_b"]]
    in_specs += [_full_block((1, H)), _full_block((1, 1))]

    kernel = functools.partial(
        _fused_lstm_fc_kernel,
        num_layers=num_layers, seq_len=T, batch_pad=B_pad, hidden=H,
    )
    out_pad = pl.pallas_call(
        kernel,
        out_shape=jax.ShapeDtypeStruct((B_pad, 128), jnp.float32),
        in_specs=in_specs,
        out_specs=_full_block((B_pad, 128)),
        scratch_shapes=[pltpu.VMEM((T * B_pad, H), jnp.float32)],
    )(*inputs)
    # TODO(synk): if T*B*H is scaled up, chunk the hoisted gx projection over a
    # time grid (Buffered(2)) and set vmem_limit_bytes explicitly for v7x.
    return out_pad[:B, :1]


# ------------------------- deterministic parameters --------------------------

def init_params(key, input_size, hidden_size, num_layers):
    """PyTorch-style uniform(-1/sqrt(H), 1/sqrt(H)) init, deterministic."""
    k = 1.0 / jnp.sqrt(jnp.float32(hidden_size))
    layers = []
    for l in range(num_layers):
        d_in = input_size if l == 0 else hidden_size
        key, k1, k2, k3, k4 = jax.random.split(key, 5)
        w_ih = jax.random.uniform(k1, (4 * hidden_size, d_in), jnp.float32, -k, k)
        w_hh = jax.random.uniform(k2, (4 * hidden_size, hidden_size), jnp.float32, -k, k)
        b_ih = jax.random.uniform(k3, (4 * hidden_size,), jnp.float32, -k, k)
        b_hh = jax.random.uniform(k4, (4 * hidden_size,), jnp.float32, -k, k)
        layers.append(dict(
            wih_t=jnp.transpose(w_ih),                 # (D_in, 4H)
            whh_t=jnp.transpose(w_hh),                 # (H, 4H)
            bias=(b_ih + b_hh).reshape(1, -1),         # (1, 4H)
        ))
    key, k5, k6 = jax.random.split(key, 3)
    w_fc = jax.random.uniform(k5, (1, hidden_size), jnp.float32, -k, k)
    b_fc = jax.random.uniform(k6, (1,), jnp.float32, -k, k)
    return dict(
        lstm_layers=layers,
        fc_w=w_fc,                                     # (1, H)
        fc_b=b_fc.reshape(1, 1),                       # (1, 1)
    )


# ------------------------------ pure-JAX reference ---------------------------

def reference_forward(x, params):
    seq = jnp.transpose(x, (1, 0, 2))                  # (T, B, D)
    H = params["lstm_layers"][0]["whh_t"].shape[0]
    B = x.shape[0]
    for layer in params["lstm_layers"]:
        def step(carry, x_t, layer=layer):
            h, c = carry
            gates = x_t @ layer["wih_t"] + h @ layer["whh_t"] + layer["bias"]
            i = jax.nn.sigmoid(gates[:, 0 * H:1 * H])
            f = jax.nn.sigmoid(gates[:, 1 * H:2 * H])
            g = jnp.tanh(gates[:, 2 * H:3 * H])
            o = jax.nn.sigmoid(gates[:, 3 * H:4 * H])
            c = f * c + i * g
            h = o * jnp.tanh(c)
            return (h, c), h
        init = (jnp.zeros((B, H), jnp.float32), jnp.zeros((B, H), jnp.float32))
        _, seq = jax.lax.scan(step, init, seq)
    return seq[-1] @ params["fc_w"].T + params["fc_b"]


# ----------------------------------- main ------------------------------------

if __name__ == "__main__":
    input_size = 4
    hidden_size = 32
    num_stacked_layers = 2
    batch = 2
    seq_len = 8

    root = jax.random.PRNGKey(0)
    k_param, k_x = jax.random.split(root)
    params = init_params(k_param, input_size, hidden_size, num_stacked_layers)
    x = jax.random.normal(k_x, (batch, seq_len, input_size), jnp.float32)

    out = jax.block_until_ready(lstm_model_forward(x, params))
    ref = jax.block_until_ready(reference_forward(x, params))

    assert out.shape == (batch, 1), out.shape
    assert jnp.allclose(out, ref, atol=1e-5, rtol=1e-5), (out, ref)

    print("KERNEL_OK")
</pallas_src>

<mosaic_0001>
module attributes {stable_mosaic.version = 11 : i64} {
  func.func @_fused_lstm_fc_kernel(%arg0: memref<64x4xf32, #tpu.memory_space<vmem>>, %arg1: memref<4x128xf32, #tpu.memory_space<vmem>>, %arg2: memref<32x128xf32, #tpu.memory_space<vmem>>, %arg3: memref<1x128xf32, #tpu.memory_space<vmem>>, %arg4: memref<32x128xf32, #tpu.memory_space<vmem>>, %arg5: memref<32x128xf32, #tpu.memory_space<vmem>>, %arg6: memref<1x128xf32, #tpu.memory_space<vmem>>, %arg7: memref<1x32xf32, #tpu.memory_space<vmem>>, %arg8: memref<1x1xf32, #tpu.memory_space<vmem>>, %arg9: memref<8x128xf32, #tpu.memory_space<vmem>>, %arg10: memref<64x32xf32, #tpu.memory_space<vmem>>) attributes {dimension_semantics = [], scalar_prefetch = 0 : i64, scratch_operands = 1 : i64, tpu.core_type = #tpu.core_type<tc>} {
    %0 = tpu.iota {dimensions = array<i32: 1>} : vector<8x128xi32>
    %c64_i32 = arith.constant 64 : i32
    %1 = vector.broadcast %c64_i32 : i32 to vector<8x128xi32>
    %2 = arith.cmpi sge, %0, %1 : vector<8x128xi32>
    %c96_i32 = arith.constant 96 : i32
    %3 = vector.broadcast %c96_i32 : i32 to vector<8x128xi32>
    %4 = arith.cmpi slt, %0, %3 : vector<8x128xi32>
    %5 = arith.andi %2, %4 : vector<8x128xi1>
    %c0 = arith.constant 0 : index
    %c0_0 = arith.constant 0 : index
    %6 = vector.load %arg1[%c0, %c0_0] : memref<4x128xf32, #tpu.memory_space<vmem>>, vector<4x128xf32>
    %c0_1 = arith.constant 0 : index
    %c0_2 = arith.constant 0 : index
    %7 = vector.load %arg2[%c0_1, %c0_2] : memref<32x128xf32, #tpu.memory_space<vmem>>, vector<32x128xf32>
    %c0_3 = arith.constant 0 : index
    %c0_4 = arith.constant 0 : index
    %8 = vector.load %arg3[%c0_3, %c0_4] : memref<1x128xf32, #tpu.memory_space<vmem>>, vector<1x128xf32>
    %c0_5 = arith.constant 0 : index
    %c0_6 = arith.constant 0 : index
    %9 = vector.load %arg0[%c0_5, %c0_6] : memref<64x4xf32, #tpu.memory_space<vmem>>, vector<64x4xf32>
    %cst = arith.constant dense<0.000000e+00> : vector<64x128xf32>
    %10 = tpu.matmul %9, %6, %cst {dimension_numbers = #tpu.dot_dimension_numbers<[1], [0], [0], [1], [0, 0, 1, 1], [], []>} : vector<64x4xf32>, vector<4x128xf32>, vector<64x128xf32> -> vector<64x128xf32>
    %11 = vector.broadcast %8 : vector<1x128xf32> to vector<64x128xf32>
    %12 = arith.addf %10, %11 : vector<64x128xf32>
    %cst_7 = arith.constant 0.000000e+00 : f32
    %13 = vector.broadcast %cst_7 : f32 to vector<8x32xf32>
    %cst_8 = arith.constant 0.000000e+00 : f32
    %14 = vector.broadcast %cst_8 : f32 to vector<8x32xf32>
    %15 = vector.extract_strided_slice %12 {offsets = [0, 0], sizes = [8, 128], strides = [1, 1]} : vector<64x128xf32> to vector<8x128xf32>
    %cst_9 = arith.constant dense<0.000000e+00> : vector<8x128xf32>
    %16 = tpu.matmul %13, %7, %cst_9 {dimension_numbers = #tpu.dot_dimension_numbers<[1], [0], [0], [1], [0, 0, 1, 1], [], []>} : vector<8x32xf32>, vector<32x128xf32>, vector<8x128xf32> -> vector<8x128xf32>
    %17 = arith.addf %15, %16 : vector<8x128xf32>
    %cst_10 = arith.constant 5.000000e-01 : f32
    %18 = vector.broadcast %cst_10 : f32 to vector<8x128xf32>
    %19 = arith.mulf %18, %17 : vector<8x128xf32>
    %20 = arith.select %5, %17, %19 : vector<8x128xi1>, vector<8x128xf32>
    %21 = math.tanh %20 : vector<8x128xf32>
    %cst_11 = arith.constant 5.000000e-01 : f32
    %22 = vector.broadcast %cst_11 : f32 to vector<8x128xf32>
    %23 = arith.mulf %22, %21 : vector<8x128xf32>
    %cst_12 = arith.constant 5.000000e-01 : f32
    %24 = vector.broadcast %cst_12 : f32 to vector<8x128xf32>
    %25 = arith.addf %23, %24 : vector<8x128xf32>
    %26 = arith.select %5, %21, %25 : vector<8x128xi1>, vector<8x128xf32>
    %27 = vector.extract_strided_slice %26 {offsets = [0, 0], sizes = [8, 32], strides = [1, 1]} : vector<8x128xf32> to vector<8x32xf32>
    %28 = vector.extract_strided_slice %26 {offsets = [0, 32], sizes = [8, 32], strides = [1, 1]} : vector<8x128xf32> to vector<8x32xf32>
    %29 = vector.extract_strided_slice %26 {offsets = [0, 64], sizes = [8, 32], strides = [1, 1]} : vector<8x128xf32> to vector<8x32xf32>
    %30 = vector.extract_strided_slice %26 {offsets = [0, 96], sizes = [8, 32], strides = [1, 1]} : vector<8x128xf32> to vector<8x32xf32>
    %31 = arith.mulf %28, %14 : vector<8x32xf32>
    %32 = arith.mulf %27, %29 : vector<8x32xf32>
    %33 = arith.addf %31, %32 : vector<8x32xf32>
    %34 = math.tanh %33 : vector<8x32xf32>
    %35 = arith.mulf %30, %34 : vector<8x32xf32>
    %c0_13 = arith.constant 0 : index
    %c0_14 = arith.constant 0 : index
    %36 = vector.load %arg10[%c0_13, %c0_14] : memref<64x32xf32, #tpu.memory_space<vmem>>, vector<8x32xf32>
    tpu.vector_store %arg10[%c0_13, %c0_14], %35 {strides = array<i32>} : memref<64x32xf32, #tpu.memory_space<vmem>>, vector<8x32xf32>,
    %37 = vector.extract_strided_slice %12 {offsets = [8, 0], sizes = [8, 128], strides = [1, 1]} : vector<64x128xf32> to vector<8x128xf32>
    %cst_15 = arith.constant dense<0.000000e+00> : vector<8x128xf32>
    %38 = tpu.matmul %35, %7, %cst_15 {dimension_numbers = #tpu.dot_dimension_numbers<[1], [0], [0], [1], [0, 0, 1, 1], [], []>} : vector<8x32xf32>, vector<32x128xf32>, vector<8x128xf32> -> vector<8x128xf32>
    %39 = arith.addf %37, %38 : vector<8x128xf32>
    %cst_16 = arith.constant 5.000000e-01 : f32
    %40 = vector.broadcast %cst_16 : f32 to vector<8x128xf32>
    %41 = arith.mulf %40, %39 : vector<8x128xf32>
    %42 = arith.select %5, %39, %41 : vector<8x128xi1>, vector<8x128xf32>
    %43 = math.tanh %42 : vector<8x128xf32>
    %cst_17 = arith.constant 5.000000e-01 : f32
    %44 = vector.broadcast %cst_17 : f32 to vector<8x128xf32>
    %45 = arith.mulf %44, %43 : vector<8x128xf32>
    %cst_18 = arith.constant 5.000000e-01 : f32
    %46 = vector.broadcast %cst_18 : f32 to vector<8x128xf32>
    %47 = arith.addf %45, %46 : vector<8x128xf32>
    %48 = arith.select %5, %43, %47 : vector<8x128xi1>, vector<8x128xf32>
    %49 = vector.extract_strided_slice %48 {offsets = [0, 0], sizes = [8, 32], strides = [1, 1]} : vector<8x128xf32> to vector<8x32xf32>
    %50 = vector.extract_strided_slice %48 {offsets = [0, 32], sizes = [8, 32], strides = [1, 1]} : vector<8x128xf32> to vector<8x32xf32>
    %51 = vector.extract_strided_slice %48 {offsets = [0, 64], sizes = [8, 32], strides = [1, 1]} : vector<8x128xf32> to vector<8x32xf32>
    %52 = vector.extract_strided_slice %48 {offsets = [0, 96], sizes = [8, 32], strides = [1, 1]} : vector<8x128xf32> to vector<8x32xf32>
    %53 = arith.mulf %50, %33 : vector<8x32xf32>
    %54 = arith.mulf %49, %51 : vector<8x32xf32>
    %55 = arith.addf %53, %54 : vector<8x32xf32>
    %56 = math.tanh %55 : vector<8x32xf32>
    %57 = arith.mulf %52, %56 : vector<8x32xf32>
    %c8 = arith.constant 8 : index
    %c0_19 = arith.constant 0 : index
    %58 = vector.load %arg10[%c8, %c0_19] : memref<64x32xf32, #tpu.memory_space<vmem>>, vector<8x32xf32>
    tpu.vector_store %arg10[%c8, %c0_19], %57 {strides = array<i32>} : memref<64x32xf32, #tpu.memory_space<vmem>>, vector<8x32xf32>,
    %59 = vector.extract_strided_slice %12 {offsets = [16, 0], sizes = [8, 128], strides = [1, 1]} : vector<64x128xf32> to vector<8x128xf32>
    %cst_20 = arith.constant dense<0.000000e+00> : vector<8x128xf32>
    %60 = tpu.matmul %57, %7, %cst_20 {dimension_numbers = #tpu.dot_dimension_numbers<[1], [0], [0], [1], [0, 0, 1, 1], [], []>} : vector<8x32xf32>, vector<32x128xf32>, vector<8x128xf32> -> vector<8x128xf32>
    %61 = arith.addf %59, %60 : vector<8x128xf32>
    %cst_21 = arith.constant 5.000000e-01 : f32
    %62 = vector.broadcast %cst_21 : f32 to vector<8x128xf32>
    %63 = arith.mulf %62, %61 : vector<8x128xf32>
    %64 = arith.select %5, %61, %63 : vector<8x128xi1>, vector<8x128xf32>
    %65 = math.tanh %64 : vector<8x128xf32>
    %cst_22 = arith.constant 5.000000e-01 : f32
    %66 = vector.broadcast %cst_22 : f32 to vector<8x128xf32>
    %67 = arith.mulf %66, %65 : vector<8x128xf32>
    %cst_23 = arith.constant 5.000000e-01 : f32
    %68 = vector.broadcast %cst_23 : f32 to vector<8x128xf32>
    %69 = arith.addf %67, %68 : vector<8x128xf32>
    %70 = arith.select %5, %65, %69 : vector<8x128xi1>, vector<8x128xf32>
    %71 = vector.extract_strided_slice %70 {offsets = [0, 0], sizes = [8, 32], strides = [1, 1]} : vector<8x128xf32> to vector<8x32xf32>
    %72 = vector.extract_strided_slice %70 {offsets = [0, 32], sizes = [8, 32], strides = [1, 1]} : vector<8x128xf32> to vector<8x32xf32>
    %73 = vector.extract_strided_slice %70 {offsets = [0, 64], sizes = [8, 32], strides = [1, 1]} : vector<8x128xf32> to vector<8x32xf32>
    %74 = vector.extract_strided_slice %70 {offsets = [0, 96], sizes = [8, 32], strides = [1, 1]} : vector<8x128xf32> to vector<8x32xf32>
    %75 = arith.mulf %72, %55 : vector<8x32xf32>
    %76 = arith.mulf %71, %73 : vector<8x32xf32>
    %77 = arith.addf %75, %76 : vector<8x32xf32>
    %78 = math.tanh %77 : vector<8x32xf32>
    %79 = arith.mulf %74, %78 : vector<8x32xf32>
    %c16 = arith.constant 16 : index
    %c0_24 = arith.constant 0 : index
    %80 = vector.load %arg10[%c16, %c0_24] : memref<64x32xf32, #tpu.memory_space<vmem>>, vector<8x32xf32>
    tpu.vector_store %arg10[%c16, %c0_24], %79 {strides = array<i32>} : memref<64x32xf32, #tpu.memory_space<vmem>>, vector<8x32xf32>,
    %81 = vector.extract_strided_slice %12 {offsets = [24, 0], sizes = [8, 128], strides = [1, 1]} : vector<64x128xf32> to vector<8x128xf32>
    %cst_25 = arith.constant dense<0.000000e+00> : vector<8x128xf32>
    %82 = tpu.matmul %79, %7, %cst_25 {dimension_numbers = #tpu.dot_dimension_numbers<[1], [0], [0], [1], [0, 0, 1, 1], [], []>} : vector<8x32xf32>, vector<32x128xf32>, vector<8x128xf32> -> vector<8x128xf32>
    %83 = arith.addf %81, %82 : vector<8x128xf32>
    %cst_26 = arith.constant 5.000000e-01 : f32
    %84 = vector.broadcast %cst_26 : f32 to vector<8x128xf32>
    %85 = arith.mulf %84, %83 : vector<8x128xf32>
    %86 = arith.select %5, %83, %85 : vector<8x128xi1>, vector<8x128xf32>
    %87 = math.tanh %86 : vector<8x128xf32>
    %cst_27 = arith.constant 5.000000e-01 : f32
    %88 = vector.broadcast %cst_27 : f32 to vector<8x128xf32>
    %89 = arith.mulf %88, %87 : vector<8x128xf32>
    %cst_28 = arith.constant 5.000000e-01 : f32
    %90 = vector.broadcast %cst_28 : f32 to vector<8x128xf32>
    %91 = arith.addf %89, %90 : vector<8x128xf32>
    %92 = arith.select %5, %87, %91 : vector<8x128xi1>, vector<8x128xf32>
    %93 = vector.extract_strided_slice %92 {offsets = [0, 0], sizes = [8, 32], strides = [1, 1]} : vector<8x128xf32> to vector<8x32xf32>
    %94 = vector.extract_strided_slice %92 {offsets = [0, 32], sizes = [8, 32], strides = [1, 1]} : vector<8x128xf32> to vector<8x32xf32>
    %95 = vector.extract_strided_slice %92 {offsets = [0, 64], sizes = [8, 32], strides = [1, 1]} : vector<8x128xf32> to vector<8x32xf32>
    %96 = vector.extract_strided_slice %92 {offsets = [0, 96], sizes = [8, 32], strides = [1, 1]} : vector<8x128xf32> to vector<8x32xf32>
    %97 = arith.mulf %94, %77 : vector<8x32xf32>
    %98 = arith.mulf %93, %95 : vector<8x32xf32>
    %99 = arith.addf %97, %98 : vector<8x32xf32>
    %100 = math.tanh %99 : vector<8x32xf32>
    %101 = arith.mulf %96, %100 : vector<8x32xf32>
    %c24 = arith.constant 24 : index
    %c0_29 = arith.constant 0 : index
    %102 = vector.load %arg10[%c24, %c0_29] : memref<64x32xf32, #tpu.memory_space<vmem>>, vector<8x32xf32>
    tpu.vector_store %arg10[%c24, %c0_29], %101 {strides = array<i32>} : memref<64x32xf32, #tpu.memory_space<vmem>>, vector<8x32xf32>,
    %103 = vector.extract_strided_slice %12 {offsets = [32, 0], sizes = [8, 128], strides = [1, 1]} : vector<64x128xf32> to vector<8x128xf32>
    %cst_30 = arith.constant dense<0.000000e+00> : vector<8x128xf32>
    %104 = tpu.matmul %101, %7, %cst_30 {dimension_numbers = #tpu.dot_dimension_numbers<[1], [0], [0], [1], [0, 0, 1, 1], [], []>} : vector<8x32xf32>, vector<32x128xf32>, vector<8x128xf32> -> vector<8x128xf32>
    %105 = arith.addf %103, %104 : vector<8x128xf32>
    %cst_31 = arith.constant 5.000000e-01 : f32
    %106 = vector.broadcast %cst_31 : f32 to vector<8x128xf32>
    %107 = arith.mulf %106, %105 : vector<8x128xf32>
    %108 = arith.select %5, %105, %107 : vector<8x128xi1>, vector<8x128xf32>
    %109 = math.tanh %108 : vector<8x128xf32>
    %cst_32 = arith.constant 5.000000e-01 : f32
    %110 = vector.broadcast %cst_32 : f32 to vector<8x128xf32>
    %111 = arith.mulf %110, %109 : vector<8x128xf32>
    %cst_33 = arith.constant 5.000000e-01 : f32
    %112 = vector.broadcast %cst_33 : f32 to vector<8x128xf32>
    %113 = arith.addf %111, %112 : vector<8x128xf32>
    %114 = arith.select %5, %109, %113 : vector<8x128xi1>, vector<8x128xf32>
    %115 = vector.extract_strided_slice %114 {offsets = [0, 0], sizes = [8, 32], strides = [1, 1]} : vector<8x128xf32> to vector<8x32xf32>
    %116 = vector.extract_strided_slice %114 {offsets = [0, 32], sizes = [8, 32], strides = [1, 1]} : vector<8x128xf32> to vector<8x32xf32>
    %117 = vector.extract_strided_slice %114 {offsets = [0, 64], sizes = [8, 32], strides = [1, 1]} : vector<8x128xf32> to vector<8x32xf32>
    %118 = vector.extract_strided_slice %114 {offsets = [0, 96], sizes = [8, 32], strides = [1, 1]} : vector<8x128xf32> to vector<8x32xf32>
    %119 = arith.mulf %116, %99 : vector<8x32xf32>
    %120 = arith.mulf %115, %117 : vector<8x32xf32>
    %121 = arith.addf %119, %120 : vector<8x32xf32>
    %122 = math.tanh %121 : vector<8x32xf32>
    %123 = arith.mulf %118, %122 : vector<8x32xf32>
    %c32 = arith.constant 32 : index
    %c0_34 = arith.constant 0 : index
    %124 = vector.load %arg10[%c32, %c0_34] : memref<64x32xf32, #tpu.memory_space<vmem>>, vector<8x32xf32>
    tpu.vector_store %arg10[%c32, %c0_34], %123 {strides = array<i32>} : memref<64x32xf32, #tpu.memory_space<vmem>>, vector<8x32xf32>,
    %125 = vector.extract_strided_slice %12 {offsets = [40, 0], sizes = [8, 128], strides = [1, 1]} : vector<64x128xf32> to vector<8x128xf32>
    %cst_35 = arith.constant dense<0.000000e+00> : vector<8x128xf32>
    %126 = tpu.matmul %123, %7, %cst_35 {dimension_numbers = #tpu.dot_dimension_numbers<[1], [0], [0], [1], [0, 0, 1, 1], [], []>} : vector<8x32xf32>, vector<32x128xf32>, vector<8x128xf32> -> vector<8x128xf32>
    %127 = arith.addf %125, %126 : vector<8x128xf32>
    %cst_36 = arith.constant 5.000000e-01 : f32
    %128 = vector.broadcast %cst_36 : f32 to vector<8x128xf32>
    %129 = arith.mulf %128, %127 : vector<8x128xf32>
    %130 = arith.select %5, %127, %129 : vector<8x128xi1>, vector<8x128xf32>
    %131 = math.tanh %130 : vector<8x128xf32>
    %cst_37 = arith.constant 5.000000e-01 : f32
    %132 = vector.broadcast %cst_37 : f32 to vector<8x128xf32>
    %133 = arith.mulf %132, %131 : vector<8x128xf32>
    %cst_38 = arith.constant 5.000000e-01 : f32
    %134 = vector.broadcast %cst_38 : f32 to vector<8x128xf32>
    %135 = arith.addf %133, %134 : vector<8x128xf32>
    %136 = arith.select %5, %131, %135 : vector<8x128xi1>, vector<8x128xf32>
    %137 = vector.extract_strided_slice %136 {offsets = [0, 0], sizes = [8, 32], strides = [1, 1]} : vector<8x128xf32> to vector<8x32xf32>
    %138 = vector.extract_strided_slice %136 {offsets = [0, 32], sizes = [8, 32], strides = [1, 1]} : vector<8x128xf32> to vector<8x32xf32>
    %139 = vector.extract_strided_slice %136 {offsets = [0, 64], sizes = [8, 32], strides = [1, 1]} : vector<8x128xf32> to vector<8x32xf32>
    %140 = vector.extract_strided_slice %136 {offsets = [0, 96], sizes = [8, 32], strides = [1, 1]} : vector<8x128xf32> to vector<8x32xf32>
    %141 = arith.mulf %138, %121 : vector<8x32xf32>
    %142 = arith.mulf %137, %139 : vector<8x32xf32>
    %143 = arith.addf %141, %142 : vector<8x32xf32>
    %144 = math.tanh %143 : vector<8x32xf32>
    %145 = arith.mulf %140, %144 : vector<8x32xf32>
    %c40 = arith.constant 40 : index
    %c0_39 = arith.constant 0 : index
    %146 = vector.load %arg10[%c40, %c0_39] : memref<64x32xf32, #tpu.memory_space<vmem>>, vector<8x32xf32>
    tpu.vector_store %arg10[%c40, %c0_39], %145 {strides = array<i32>} : memref<64x32xf32, #tpu.memory_space<vmem>>, vector<8x32xf32>,
    %147 = vector.extract_strided_slice %12 {offsets = [48, 0], sizes = [8, 128], strides = [1, 1]} : vector<64x128xf32> to vector<8x128xf32>
    %cst_40 = arith.constant dense<0.000000e+00> : vector<8x128xf32>
    %148 = tpu.matmul %145, %7, %cst_40 {dimension_numbers = #tpu.dot_dimension_numbers<[1], [0], [0], [1], [0, 0, 1, 1], [], []>} : vector<8x32xf32>, vector<32x128xf32>, vector<8x128xf32> -> vector<8x128xf32>
    %149 = arith.addf %147, %148 : vector<8x128xf32>
    %cst_41 = arith.constant 5.000000e-01 : f32
    %150 = vector.broadcast %cst_41 : f32 to vector<8x128xf32>
    %151 = arith.mulf %150, %149 : vector<8x128xf32>
    %152 = arith.select %5, %149, %151 : vector<8x128xi1>, vector<8x128xf32>
    %153 = math.tanh %152 : vector<8x128xf32>
    %cst_42 = arith.constant 5.000000e-01 : f32
    %154 = vector.broadcast %cst_42 : f32 to vector<8x128xf32>
    %155 = arith.mulf %154, %153 : vector<8x128xf32>
    %cst_43 = arith.constant 5.000000e-01 : f32
    %156 = vector.broadcast %cst_43 : f32 to vector<8x128xf32>
    %157 = arith.addf %155, %156 : vector<8x128xf32>
    %158 = arith.select %5, %153, %157 : vector<8x128xi1>, vector<8x128xf32>
    %159 = vector.extract_strided_slice %158 {offsets = [0, 0], sizes = [8, 32], strides = [1, 1]} : vector<8x128xf32> to vector<8x32xf32>
    %160 = vector.extract_strided_slice %158 {offsets = [0, 32], sizes = [8, 32], strides = [1, 1]} : vector<8x128xf32> to vector<8x32xf32>
    %161 = vector.extract_strided_slice %158 {offsets = [0, 64], sizes = [8, 32], strides = [1, 1]} : vector<8x128xf32> to vector<8x32xf32>
    %162 = vector.extract_strided_slice %158 {offsets = [0, 96], sizes = [8, 32], strides = [1, 1]} : vector<8x128xf32> to vector<8x32xf32>
    %163 = arith.mulf %160, %143 : vector<8x32xf32>
    %164 = arith.mulf %159, %161 : vector<8x32xf32>
    %165 = arith.addf %163, %164 : vector<8x32xf32>
    %166 = math.tanh %165 : vector<8x32xf32>
    %167 = arith.mulf %162, %166 : vector<8x32xf32>
    %c48 = arith.constant 48 : index
    %c0_44 = arith.constant 0 : index
    %168 = vector.load %arg10[%c48, %c0_44] : memref<64x32xf32, #tpu.memory_space<vmem>>, vector<8x32xf32>
    tpu.vector_store %arg10[%c48, %c0_44], %167 {strides = array<i32>} : memref<64x32xf32, #tpu.memory_space<vmem>>, vector<8x32xf32>,
    %169 = vector.extract_strided_slice %12 {offsets = [56, 0], sizes = [8, 128], strides = [1, 1]} : vector<64x128xf32> to vector<8x128xf32>
    %cst_45 = arith.constant dense<0.000000e+00> : vector<8x128xf32>
    %170 = tpu.matmul %167, %7, %cst_45 {dimension_numbers = #tpu.dot_dimension_numbers<[1], [0], [0], [1], [0, 0, 1, 1], [], []>} : vector<8x32xf32>, vector<32x128xf32>, vector<8x128xf32> -> vector<8x128xf32>
    %171 = arith.addf %169, %170 : vector<8x128xf32>
    %cst_46 = arith.constant 5.000000e-01 : f32
    %172 = vector.broadcast %cst_46 : f32 to vector<8x128xf32>
    %173 = arith.mulf %172, %171 : vector<8x128xf32>
    %174 = arith.select %5, %171, %173 : vector<8x128xi1>, vector<8x128xf32>
    %175 = math.tanh %174 : vector<8x128xf32>
    %cst_47 = arith.constant 5.000000e-01 : f32
    %176 = vector.broadcast %cst_47 : f32 to vector<8x128xf32>
    %177 = arith.mulf %176, %175 : vector<8x128xf32>
    %cst_48 = arith.constant 5.000000e-01 : f32
    %178 = vector.broadcast %cst_48 : f32 to vector<8x128xf32>
    %179 = arith.addf %177, %178 : vector<8x128xf32>
    %180 = arith.select %5, %175, %179 : vector<8x128xi1>, vector<8x128xf32>
    %181 = vector.extract_strided_slice %180 {offsets = [0, 0], sizes = [8, 32], strides = [1, 1]} : vector<8x128xf32> to vector<8x32xf32>
    %182 = vector.extract_strided_slice %180 {offsets = [0, 32], sizes = [8, 32], strides = [1, 1]} : vector<8x128xf32> to vector<8x32xf32>
    %183 = vector.extract_strided_slice %180 {offsets = [0, 64], sizes = [8, 32], strides = [1, 1]} : vector<8x128xf32> to vector<8x32xf32>
    %184 = vector.extract_strided_slice %180 {offsets = [0, 96], sizes = [8, 32], strides = [1, 1]} : vector<8x128xf32> to vector<8x32xf32>
    %185 = arith.mulf %182, %165 : vector<8x32xf32>
    %186 = arith.mulf %181, %183 : vector<8x32xf32>
    %187 = arith.addf %185, %186 : vector<8x32xf32>
    %188 = math.tanh %187 : vector<8x32xf32>
    %189 = arith.mulf %184, %188 : vector<8x32xf32>
    %c56 = arith.constant 56 : index
    %c0_49 = arith.constant 0 : index
    %190 = vector.load %arg10[%c56, %c0_49] : memref<64x32xf32, #tpu.memory_space<vmem>>, vector<8x32xf32>
    tpu.vector_store %arg10[%c56, %c0_49], %189 {strides = array<i32>} : memref<64x32xf32, #tpu.memory_space<vmem>>, vector<8x32xf32>,
    %c0_50 = arith.constant 0 : index
    %c0_51 = arith.constant 0 : index
    %191 = vector.load %arg4[%c0_50, %c0_51] : memref<32x128xf32, #tpu.memory_space<vmem>>, vector<32x128xf32>
    %c0_52 = arith.constant 0 : index
    %c0_53 = arith.constant 0 : index
    %192 = vector.load %arg5[%c0_52, %c0_53] : memref<32x128xf32, #tpu.memory_space<vmem>>, vector<32x128xf32>
    %c0_54 = arith.constant 0 : index
    %c0_55 = arith.constant 0 : index
    %193 = vector.load %arg6[%c0_54, %c0_55] : memref<1x128xf32, #tpu.memory_space<vmem>>, vector<1x128xf32>
    %c0_56 = arith.constant 0 : index
    %c0_57 = arith.constant 0 : index
    %194 = vector.load %arg10[%c0_56, %c0_57] : memref<64x32xf32, #tpu.memory_space<vmem>>, vector<64x32xf32>
    %cst_58 = arith.constant dense<0.000000e+00> : vector<64x128xf32>
    %195 = tpu.matmul %194, %191, %cst_58 {dimension_numbers = #tpu.dot_dimension_numbers<[1], [0], [0], [1], [0, 0, 1, 1], [], []>} : vector<64x32xf32>, vector<32x128xf32>, vector<64x128xf32> -> vector<64x128xf32>
    %196 = vector.broadcast %193 : vector<1x128xf32> to vector<64x128xf32>
    %197 = arith.addf %195, %196 : vector<64x128xf32>
    %cst_59 = arith.constant 0.000000e+00 : f32
    %198 = vector.broadcast %cst_59 : f32 to vector<8x32xf32>
    %cst_60 = arith.constant 0.000000e+00 : f32
    %199 = vector.broadcast %cst_60 : f32 to vector<8x32xf32>
    %200 = vector.extract_strided_slice %197 {offsets = [0, 0], sizes = [8, 128], strides = [1, 1]} : vector<64x128xf32> to vector<8x128xf32>
    %cst_61 = arith.constant dense<0.000000e+00> : vector<8x128xf32>
    %201 = tpu.matmul %198, %192, %cst_61 {dimension_numbers = #tpu.dot_dimension_numbers<[1], [0], [0], [1], [0, 0, 1, 1], [], []>} : vector<8x32xf32>, vector<32x128xf32>, vector<8x128xf32> -> vector<8x128xf32>
    %202 = arith.addf %200, %201 : vector<8x128xf32>
    %cst_62 = arith.constant 5.000000e-01 : f32
    %203 = vector.broadcast %cst_62 : f32 to vector<8x128xf32>
    %204 = arith.mulf %203, %202 : vector<8x128xf32>
    %205 = arith.select %5, %202, %204 : vector<8x128xi1>, vector<8x128xf32>
    %206 = math.tanh %205 : vector<8x128xf32>
    %cst_63 = arith.constant 5.000000e-01 : f32
    %207 = vector.broadcast %cst_63 : f32 to vector<8x128xf32>
    %208 = arith.mulf %207, %206 : vector<8x128xf32>
    %cst_64 = arith.constant 5.000000e-01 : f32
    %209 = vector.broadcast %cst_64 : f32 to vector<8x128xf32>
    %210 = arith.addf %208, %209 : vector<8x128xf32>
    %211 = arith.select %5, %206, %210 : vector<8x128xi1>, vector<8x128xf32>
    %212 = vector.extract_strided_slice %211 {offsets = [0, 0], sizes = [8, 32], strides = [1, 1]} : vector<8x128xf32> to vector<8x32xf32>
    %213 = vector.extract_strided_slice %211 {offsets = [0, 32], sizes = [8, 32], strides = [1, 1]} : vector<8x128xf32> to vector<8x32xf32>
    %214 = vector.extract_strided_slice %211 {offsets = [0, 64], sizes = [8, 32], strides = [1, 1]} : vector<8x128xf32> to vector<8x32xf32>
    %215 = vector.extract_strided_slice %211 {offsets = [0, 96], sizes = [8, 32], strides = [1, 1]} : vector<8x128xf32> to vector<8x32xf32>
    %216 = arith.mulf %213, %199 : vector<8x32xf32>
    %217 = arith.mulf %212, %214 : vector<8x32xf32>
    %218 = arith.addf %216, %217 : vector<8x32xf32>
    %219 = math.tanh %218 : vector<8x32xf32>
    %220 = arith.mulf %215, %219 : vector<8x32xf32>
    %221 = vector.extract_strided_slice %197 {offsets = [8, 0], sizes = [8, 128], strides = [1, 1]} : vector<64x128xf32> to vector<8x128xf32>
    %cst_65 = arith.constant dense<0.000000e+00> : vector<8x128xf32>
    %222 = tpu.matmul %220, %192, %cst_65 {dimension_numbers = #tpu.dot_dimension_numbers<[1], [0], [0], [1], [0, 0, 1, 1], [], []>} : vector<8x32xf32>, vector<32x128xf32>, vector<8x128xf32> -> vector<8x128xf32>
    %223 = arith.addf %221, %222 : vector<8x128xf32>
    %cst_66 = arith.constant 5.000000e-01 : f32
    %224 = vector.broadcast %cst_66 : f32 to vector<8x128xf32>
    %225 = arith.mulf %224, %223 : vector<8x128xf32>
    %226 = arith.select %5, %223, %225 : vector<8x128xi1>, vector<8x128xf32>
    %227 = math.tanh %226 : vector<8x128xf32>
    %cst_67 = arith.constant 5.000000e-01 : f32
    %228 = vector.broadcast %cst_67 : f32 to vector<8x128xf32>
    %229 = arith.mulf %228, %227 : vector<8x128xf32>
    %cst_68 = arith.constant 5.000000e-01 : f32
    %230 = vector.broadcast %cst_68 : f32 to vector<8x128xf32>
    %231 = arith.addf %229, %230 : vector<8x128xf32>
    %232 = arith.select %5, %227, %231 : vector<8x128xi1>, vector<8x128xf32>
    %233 = vector.extract_strided_slice %232 {offsets = [0, 0], sizes = [8, 32], strides = [1, 1]} : vector<8x128xf32> to vector<8x32xf32>
    %234 = vector.extract_strided_slice %232 {offsets = [0, 32], sizes = [8, 32], strides = [1, 1]} : vector<8x128xf32> to vector<8x32xf32>
    %235 = vector.extract_strided_slice %232 {offsets = [0, 64], sizes = [8, 32], strides = [1, 1]} : vector<8x128xf32> to vector<8x32xf32>
    %236 = vector.extract_strided_slice %232 {offsets = [0, 96], sizes = [8, 32], strides = [1, 1]} : vector<8x128xf32> to vector<8x32xf32>
    %237 = arith.mulf %234, %218 : vector<8x32xf32>
    %238 = arith.mulf %233, %235 : vector<8x32xf32>
    %239 = arith.addf %237, %238 : vector<8x32xf32>
    %240 = math.tanh %239 : vector<8x32xf32>
    %241 = arith.mulf %236, %240 : vector<8x32xf32>
    %242 = vector.extract_strided_slice %197 {offsets = [16, 0], sizes = [8, 128], strides = [1, 1]} : vector<64x128xf32> to vector<8x128xf32>
    %cst_69 = arith.constant dense<0.000000e+00> : vector<8x128xf32>
    %243 = tpu.matmul %241, %192, %cst_69 {dimension_numbers = #tpu.dot_dimension_numbers<[1], [0], [0], [1], [0, 0, 1, 1], [], []>} : vector<8x32xf32>, vector<32x128xf32>, vector<8x128xf32> -> vector<8x128xf32>
    %244 = arith.addf %242, %243 : vector<8x128xf32>
    %cst_70 = arith.constant 5.000000e-01 : f32
    %245 = vector.broadcast %cst_70 : f32 to vector<8x128xf32>
    %246 = arith.mulf %245, %244 : vector<8x128xf32>
    %247 = arith.select %5, %244, %246 : vector<8x128xi1>, vector<8x128xf32>
    %248 = math.tanh %247 : vector<8x128xf32>
    %cst_71 = arith.constant 5.000000e-01 : f32
    %249 = vector.broadcast %cst_71 : f32 to vector<8x128xf32>
    %250 = arith.mulf %249, %248 : vector<8x128xf32>
    %cst_72 = arith.constant 5.000000e-01 : f32
    %251 = vector.broadcast %cst_72 : f32 to vector<8x128xf32>
    %252 = arith.addf %250, %251 : vector<8x128xf32>
    %253 = arith.select %5, %248, %252 : vector<8x128xi1>, vector<8x128xf32>
    %254 = vector.extract_strided_slice %253 {offsets = [0, 0], sizes = [8, 32], strides = [1, 1]} : vector<8x128xf32> to vector<8x32xf32>
    %255 = vector.extract_strided_slice %253 {offsets = [0, 32], sizes = [8, 32], strides = [1, 1]} : vector<8x128xf32> to vector<8x32xf32>
    %256 = vector.extract_strided_slice %253 {offsets = [0, 64], sizes = [8, 32], strides = [1, 1]} : vector<8x128xf32> to vector<8x32xf32>
    %257 = vector.extract_strided_slice %253 {offsets = [0, 96], sizes = [8, 32], strides = [1, 1]} : vector<8x128xf32> to vector<8x32xf32>
    %258 = arith.mulf %255, %239 : vector<8x32xf32>
    %259 = arith.mulf %254, %256 : vector<8x32xf32>
    %260 = arith.addf %258, %259 : vector<8x32xf32>
    %261 = math.tanh %260 : vector<8x32xf32>
    %262 = arith.mulf %257, %261 : vector<8x32xf32>
    %263 = vector.extract_strided_slice %197 {offsets = [24, 0], sizes = [8, 128], strides = [1, 1]} : vector<64x128xf32> to vector<8x128xf32>
    %cst_73 = arith.constant dense<0.000000e+00> : vector<8x128xf32>
    %264 = tpu.matmul %262, %192, %cst_73 {dimension_numbers = #tpu.dot_dimension_numbers<[1], [0], [0], [1], [0, 0, 1, 1], [], []>} : vector<8x32xf32>, vector<32x128xf32>, vector<8x128xf32> -> vector<8x128xf32>
    %265 = arith.addf %263, %264 : vector<8x128xf32>
    %cst_74 = arith.constant 5.000000e-01 : f32
    %266 = vector.broadcast %cst_74 : f32 to vector<8x128xf32>
    %267 = arith.mulf %266, %265 : vector<8x128xf32>
    %268 = arith.select %5, %265, %267 : vector<8x128xi1>, vector<8x128xf32>
    %269 = math.tanh %268 : vector<8x128xf32>
    %cst_75 = arith.constant 5.000000e-01 : f32
    %270 = vector.broadcast %cst_75 : f32 to vector<8x128xf32>
    %271 = arith.mulf %270, %269 : vector<8x128xf32>
    %cst_76 = arith.constant 5.000000e-01 : f32
    %272 = vector.broadcast %cst_76 : f32 to vector<8x128xf32>
    %273 = arith.addf %271, %272 : vector<8x128xf32>
    %274 = arith.select %5, %269, %273 : vector<8x128xi1>, vector<8x128xf32>
    %275 = vector.extract_strided_slice %274 {offsets = [0, 0], sizes = [8, 32], strides = [1, 1]} : vector<8x128xf32> to vector<8x32xf32>
    %276 = vector.extract_strided_slice %274 {offsets = [0, 32], sizes = [8, 32], strides = [1, 1]} : vector<8x128xf32> to vector<8x32xf32>
    %277 = vector.extract_strided_slice %274 {offsets = [0, 64], sizes = [8, 32], strides = [1, 1]} : vector<8x128xf32> to vector<8x32xf32>
    %278 = vector.extract_strided_slice %274 {offsets = [0, 96], sizes = [8, 32], strides = [1, 1]} : vector<8x128xf32> to vector<8x32xf32>
    %279 = arith.mulf %276, %260 : vector<8x32xf32>
    %280 = arith.mulf %275, %277 : vector<8x32xf32>
    %281 = arith.addf %279, %280 : vector<8x32xf32>
    %282 = math.tanh %281 : vector<8x32xf32>
    %283 = arith.mulf %278, %282 : vector<8x32xf32>
    %284 = vector.extract_strided_slice %197 {offsets = [32, 0], sizes = [8, 128], strides = [1, 1]} : vector<64x128xf32> to vector<8x128xf32>
    %cst_77 = arith.constant dense<0.000000e+00> : vector<8x128xf32>
    %285 = tpu.matmul %283, %192, %cst_77 {dimension_numbers = #tpu.dot_dimension_numbers<[1], [0], [0], [1], [0, 0, 1, 1], [], []>} : vector<8x32xf32>, vector<32x128xf32>, vector<8x128xf32> -> vector<8x128xf32>
    %286 = arith.addf %284, %285 : vector<8x128xf32>
    %cst_78 = arith.constant 5.000000e-01 : f32
    %287 = vector.broadcast %cst_78 : f32 to vector<8x128xf32>
    %288 = arith.mulf %287, %286 : vector<8x128xf32>
    %289 = arith.select %5, %286, %288 : vector<8x128xi1>, vector<8x128xf32>
    %290 = math.tanh %289 : vector<8x128xf32>
    %cst_79 = arith.constant 5.000000e-01 : f32
    %291 = vector.broadcast %cst_79 : f32 to vector<8x128xf32>
    %292 = arith.mulf %291, %290 : vector<8x128xf32>
    %cst_80 = arith.constant 5.000000e-01 : f32
    %293 = vector.broadcast %cst_80 : f32 to vector<8x128xf32>
    %294 = arith.addf %292, %293 : vector<8x128xf32>
    %295 = arith.select %5, %290, %294 : vector<8x128xi1>, vector<8x128xf32>
    %296 = vector.extract_strided_slice %295 {offsets = [0, 0], sizes = [8, 32], strides = [1, 1]} : vector<8x128xf32> to vector<8x32xf32>
    %297 = vector.extract_strided_slice %295 {offsets = [0, 32], sizes = [8, 32], strides = [1, 1]} : vector<8x128xf32> to vector<8x32xf32>
    %298 = vector.extract_strided_slice %295 {offsets = [0, 64], sizes = [8, 32], strides = [1, 1]} : vector<8x128xf32> to vector<8x32xf32>
    %299 = vector.extract_strided_slice %295 {offsets = [0, 96], sizes = [8, 32], strides = [1, 1]} : vector<8x128xf32> to vector<8x32xf32>
    %300 = arith.mulf %297, %281 : vector<8x32xf32>
    %301 = arith.mulf %296, %298 : vector<8x32xf32>
    %302 = arith.addf %300, %301 : vector<8x32xf32>
    %303 = math.tanh %302 : vector<8x32xf32>
    %304 = arith.mulf %299, %303 : vector<8x32xf32>
    %305 = vector.extract_strided_slice %197 {offsets = [40, 0], sizes = [8, 128], strides = [1, 1]} : vector<64x128xf32> to vector<8x128xf32>
    %cst_81 = arith.constant dense<0.000000e+00> : vector<8x128xf32>
    %306 = tpu.matmul %304, %192, %cst_81 {dimension_numbers = #tpu.dot_dimension_numbers<[1], [0], [0], [1], [0, 0, 1, 1], [], []>} : vector<8x32xf32>, vector<32x128xf32>, vector<8x128xf32> -> vector<8x128xf32>
    %307 = arith.addf %305, %306 : vector<8x128xf32>
    %cst_82 = arith.constant 5.000000e-01 : f32
    %308 = vector.broadcast %cst_82 : f32 to vector<8x128xf32>
    %309 = arith.mulf %308, %307 : vector<8x128xf32>
    %310 = arith.select %5, %307, %309 : vector<8x128xi1>, vector<8x128xf32>
    %311 = math.tanh %310 : vector<8x128xf32>
    %cst_83 = arith.constant 5.000000e-01 : f32
    %312 = vector.broadcast %cst_83 : f32 to vector<8x128xf32>
    %313 = arith.mulf %312, %311 : vector<8x128xf32>
    %cst_84 = arith.constant 5.000000e-01 : f32
    %314 = vector.broadcast %cst_84 : f32 to vector<8x128xf32>
    %315 = arith.addf %313, %314 : vector<8x128xf32>
    %316 = arith.select %5, %311, %315 : vector<8x128xi1>, vector<8x128xf32>
    %317 = vector.extract_strided_slice %316 {offsets = [0, 0], sizes = [8, 32], strides = [1, 1]} : vector<8x128xf32> to vector<8x32xf32>
    %318 = vector.extract_strided_slice %316 {offsets = [0, 32], sizes = [8, 32], strides = [1, 1]} : vector<8x128xf32> to vector<8x32xf32>
    %319 = vector.extract_strided_slice %316 {offsets = [0, 64], sizes = [8, 32], strides = [1, 1]} : vector<8x128xf32> to vector<8x32xf32>
    %320 = vector.extract_strided_slice %316 {offsets = [0, 96], sizes = [8, 32], strides = [1, 1]} : vector<8x128xf32> to vector<8x32xf32>
    %321 = arith.mulf %318, %302 : vector<8x32xf32>
    %322 = arith.mulf %317, %319 : vector<8x32xf32>
    %323 = arith.addf %321, %322 : vector<8x32xf32>
    %324 = math.tanh %323 : vector<8x32xf32>
    %325 = arith.mulf %320, %324 : vector<8x32xf32>
    %326 = vector.extract_strided_slice %197 {offsets = [48, 0], sizes = [8, 128], strides = [1, 1]} : vector<64x128xf32> to vector<8x128xf32>
    %cst_85 = arith.constant dense<0.000000e+00> : vector<8x128xf32>
    %327 = tpu.matmul %325, %192, %cst_85 {dimension_numbers = #tpu.dot_dimension_numbers<[1], [0], [0], [1], [0, 0, 1, 1], [], []>} : vector<8x32xf32>, vector<32x128xf32>, vector<8x128xf32> -> vector<8x128xf32>
    %328 = arith.addf %326, %327 : vector<8x128xf32>
    %cst_86 = arith.constant 5.000000e-01 : f32
    %329 = vector.broadcast %cst_86 : f32 to vector<8x128xf32>
    %330 = arith.mulf %329, %328 : vector<8x128xf32>
    %331 = arith.select %5, %328, %330 : vector<8x128xi1>, vector<8x128xf32>
    %332 = math.tanh %331 : vector<8x128xf32>
    %cst_87 = arith.constant 5.000000e-01 : f32
    %333 = vector.broadcast %cst_87 : f32 to vector<8x128xf32>
    %334 = arith.mulf %333, %332 : vector<8x128xf32>
    %cst_88 = arith.constant 5.000000e-01 : f32
    %335 = vector.broadcast %cst_88 : f32 to vector<8x128xf32>
    %336 = arith.addf %334, %335 : vector<8x128xf32>
    %337 = arith.select %5, %332, %336 : vector<8x128xi1>, vector<8x128xf32>
    %338 = vector.extract_strided_slice %337 {offsets = [0, 0], sizes = [8, 32], strides = [1, 1]} : vector<8x128xf32> to vector<8x32xf32>
    %339 = vector.extract_strided_slice %337 {offsets = [0, 32], sizes = [8, 32], strides = [1, 1]} : vector<8x128xf32> to vector<8x32xf32>
    %340 = vector.extract_strided_slice %337 {offsets = [0, 64], sizes = [8, 32], strides = [1, 1]} : vector<8x128xf32> to vector<8x32xf32>
    %341 = vector.extract_strided_slice %337 {offsets = [0, 96], sizes = [8, 32], strides = [1, 1]} : vector<8x128xf32> to vector<8x32xf32>
    %342 = arith.mulf %339, %323 : vector<8x32xf32>
    %343 = arith.mulf %338, %340 : vector<8x32xf32>
    %344 = arith.addf %342, %343 : vector<8x32xf32>
    %345 = math.tanh %344 : vector<8x32xf32>
    %346 = arith.mulf %341, %345 : vector<8x32xf32>
    %347 = vector.extract_strided_slice %197 {offsets = [56, 0], sizes = [8, 128], strides = [1, 1]} : vector<64x128xf32> to vector<8x128xf32>
    %cst_89 = arith.constant dense<0.000000e+00> : vector<8x128xf32>
    %348 = tpu.matmul %346, %192, %cst_89 {dimension_numbers = #tpu.dot_dimension_numbers<[1], [0], [0], [1], [0, 0, 1, 1], [], []>} : vector<8x32xf32>, vector<32x128xf32>, vector<8x128xf32> -> vector<8x128xf32>
    %349 = arith.addf %347, %348 : vector<8x128xf32>
    %cst_90 = arith.constant 5.000000e-01 : f32
    %350 = vector.broadcast %cst_90 : f32 to vector<8x128xf32>
    %351 = arith.mulf %350, %349 : vector<8x128xf32>
    %352 = arith.select %5, %349, %351 : vector<8x128xi1>, vector<8x128xf32>
    %353 = math.tanh %352 : vector<8x128xf32>
    %cst_91 = arith.constant 5.000000e-01 : f32
    %354 = vector.broadcast %cst_91 : f32 to vector<8x128xf32>
    %355 = arith.mulf %354, %353 : vector<8x128xf32>
    %cst_92 = arith.constant 5.000000e-01 : f32
    %356 = vector.broadcast %cst_92 : f32 to vector<8x128xf32>
    %357 = arith.addf %355, %356 : vector<8x128xf32>
    %358 = arith.select %5, %353, %357 : vector<8x128xi1>, vector<8x128xf32>
    %359 = vector.extract_strided_slice %358 {offsets = [0, 0], sizes = [8, 32], strides = [1, 1]} : vector<8x128xf32> to vector<8x32xf32>
    %360 = vector.extract_strided_slice %358 {offsets = [0, 32], sizes = [8, 32], strides = [1, 1]} : vector<8x128xf32> to vector<8x32xf32>
    %361 = vector.extract_strided_slice %358 {offsets = [0, 64], sizes = [8, 32], strides = [1, 1]} : vector<8x128xf32> to vector<8x32xf32>
    %362 = vector.extract_strided_slice %358 {offsets = [0, 96], sizes = [8, 32], strides = [1, 1]} : vector<8x128xf32> to vector<8x32xf32>
    %363 = arith.mulf %360, %344 : vector<8x32xf32>
    %364 = arith.mulf %359, %361 : vector<8x32xf32>
    %365 = arith.addf %363, %364 : vector<8x32xf32>
    %366 = math.tanh %365 : vector<8x32xf32>
    %367 = arith.mulf %362, %366 : vector<8x32xf32>
    %c0_93 = arith.constant 0 : index
    %c0_94 = arith.constant 0 : index
    %368 = vector.load %arg7[%c0_93, %c0_94] : memref<1x32xf32, #tpu.memory_space<vmem>>, vector<1x32xf32>
    %369 = vector.broadcast %368 : vector<1x32xf32> to vector<8x32xf32>
    %370 = arith.mulf %367, %369 : vector<8x32xf32>
    %cst_95 = arith.constant dense<0.000000e+00> : vector<8xf32>
    %371 = vector.multi_reduction <add>, %370, %cst_95 [1] : vector<8x32xf32> to vector<8xf32>
    %372 = vector.shape_cast %371 : vector<8xf32> to vector<8x1xf32>
    %c0_96 = arith.constant 0 : index
    %c0_97 = arith.constant 0 : index
    %373 = vector.load %arg8[%c0_96, %c0_97] : memref<1x1xf32, #tpu.memory_space<vmem>>, vector<1x1xf32>
    %374 = vector.broadcast %373 : vector<1x1xf32> to vector<8x1xf32>
    %375 = arith.addf %372, %374 : vector<8x1xf32>
    %376 = vector.shape_cast %375 : vector<8x1xf32> to vector<8x1xf32>
    %377 = vector.broadcast %376 : vector<8x1xf32> to vector<8x128xf32>
    %c0_98 = arith.constant 0 : index
    %c0_99 = arith.constant 0 : index
    %378 = vector.load %arg9[%c0_98, %c0_99] : memref<8x128xf32, #tpu.memory_space<vmem>>, vector<8x128xf32>
    tpu.vector_store %arg9[%c0_98, %c0_99], %377 {strides = array<i32>} : memref<8x128xf32, #tpu.memory_space<vmem>>, vector<8x128xf32>,
    return
  }
}

</mosaic_0001>

<llo_original>
// kernel: lstm_model_forward.1
$region0: #{lstm_model_forward.1}
  #allocation0 [shape = 'u32[]', space=smem, size = 0x4, offset = 0x4, fixed_abs, tag = 'smem constant byte address 0x4 - core index']
  #allocation1 [shape = 'u32[144,128]{1,0:T(1,128)}', space=vmem, size = 0x12000, scoped, tag = 'internal scratch']
  #allocation2 [shape = 'f32[64,32]{1,0:T(8,128)}', space=vmem, size = 0x8000, scoped, tag = 'scratch operand']
  #allocation3 [shape = 'f32[1,1]{1,0:T(1,128)S(1)}', space=vmem, size = 0x200, scoped, tag = 'scoped memory for lstm_model_forward.1']
  %s0 = inlined_call_operand.vmem [shape: f32[64,4], index: 0, kind: input, shape index: {}]
  %s1 = inlined_call_operand.vmem [shape: f32[4,128], index: 1, kind: input, shape index: {}]
  %s2 = inlined_call_operand.vmem [shape: f32[32,128], index: 2, kind: input, shape index: {}]
  %s3 = inlined_call_operand.vmem [shape: f32[1,128], index: 3, kind: input, shape index: {}]
  %s4 = inlined_call_operand.vmem [shape: f32[32,128], index: 4, kind: input, shape index: {}]
  %s5 = inlined_call_operand.vmem [shape: f32[32,128], index: 5, kind: input, shape index: {}]
  %s6 = inlined_call_operand.vmem [shape: f32[1,128], index: 6, kind: input, shape index: {}]
  %s7 = inlined_call_operand.vmem [shape: f32[1,32], index: 7, kind: input, shape index: {}]
  %s8 = inlined_call_operand.<no memory space> [shape: f32[1,1], index: 8, kind: input, shape index: {}]
  %s9 = inlined_call_operand.vmem [shape: f32[8,128], index: 9, kind: output, shape index: {}]
  %s10 = sld [smem:[#allocation0]]
  $region46: #{lstm_model_forward.1} parent=0
    _
  %s12 = ssub.s32 1, %s10
  %s13 = scalar_select 0, %s12, %s10
  %v14 = vstv %s8
  %15 = vst [vmem:[#allocation3] sm:$0x1] %v14
  // Predicated region
  $region2: #{lstm_model_forward.1} parent=0 // pred_check
    _
  $region3: #{lstm_model_forward.1} parent=0 // pred_check_branch
    %17 = sbr.rel (0) target = $region5
  $region4: #{lstm_model_forward.1} parent=0 // pred_region
    _
  $region5: #{lstm_model_forward.1} parent=0 // pred_fallthru
    _
  // Predicated region
  $region6: #{lstm_model_forward.1} parent=0 // pred_check
    _
  $region7: #{lstm_model_forward.1} parent=0 // pred_check_branch
    %19 = sbr.rel (0) target = $region9
  $region8: #{lstm_model_forward.1} parent=0 // pred_region
    _
  $region9: #{lstm_model_forward.1} parent=0 // pred_fallthru
    _
  // Predicated region
  $region10: #{lstm_model_forward.1} parent=0 // pred_check
    _
  $region11: #{lstm_model_forward.1} parent=0 // pred_check_branch
    %21 = sbr.rel (0) target = $region13
  $region12: #{lstm_model_forward.1} parent=0 // pred_region
    _
  $region13: #{lstm_model_forward.1} parent=0 // pred_fallthru
    _
  // Predicated region
  $region14: #{lstm_model_forward.1} parent=0 // pred_check
    _
  $region15: #{lstm_model_forward.1} parent=0 // pred_check_branch
    %23 = sbr.rel (0) target = $region17
  $region16: #{lstm_model_forward.1} parent=0 // pred_region
    _
  $region17: #{lstm_model_forward.1} parent=0 // pred_fallthru
    _
  // Predicated region
  $region18: #{lstm_model_forward.1} parent=0 // pred_check
    _
  $region19: #{lstm_model_forward.1} parent=0 // pred_check_branch
    %25 = sbr.rel (0) target = $region21
  $region20: #{lstm_model_forward.1} parent=0 // pred_region
    _
  $region21: #{lstm_model_forward.1} parent=0 // pred_fallthru
    _
  // Predicated region
  $region22: #{lstm_model_forward.1} parent=0 // pred_check
    _
  $region23: #{lstm_model_forward.1} parent=0 // pred_check_branch
    %27 = sbr.rel (0) target = $region25
  $region24: #{lstm_model_forward.1} parent=0 // pred_region
    _
  $region25: #{lstm_model_forward.1} parent=0 // pred_fallthru
    _
  // Predicated region
  $region26: #{lstm_model_forward.1} parent=0 // pred_check
    _
  $region27: #{lstm_model_forward.1} parent=0 // pred_check_branch
    %29 = sbr.rel (0) target = $region29
  $region28: #{lstm_model_forward.1} parent=0 // pred_region
    _
  $region29: #{lstm_model_forward.1} parent=0 // pred_fallthru
    _
  // Predicated region
  $region30: #{lstm_model_forward.1} parent=0 // pred_check
    _
  $region31: #{lstm_model_forward.1} parent=0 // pred_check_branch
    %31 = sbr.rel (0) target = $region33
  $region32: #{lstm_model_forward.1} parent=0 // pred_region
    _
  $region33: #{lstm_model_forward.1} parent=0 // pred_fallthru
    _
  // Predicated region
  $region34: #{lstm_model_forward.1} parent=0 // pred_check
    _
  $region35: #{lstm_model_forward.1} parent=0 // pred_check_branch
    %33 = sbr.rel (0) target = $region37
  $region36: #{lstm_model_forward.1} parent=0 // pred_region
    _
  $region37: #{lstm_model_forward.1} parent=0 // pred_fallthru
    _
  %v34 = vlaneseq
  %v35 = vand.u32 %v34, 127
  %vm36 = vcmp.ge.s32.totalorder %v35, 64
  %vm37 = vcmp.lt.s32.totalorder %v35, 96
  %vm38 = vmand %vm36, %vm37
  %v39 = vld [vmem:[%s1] sm:$0xf]
  %v40 = vld [vmem:[%s2] sm:$0xff]
  %v41 = vld [vmem:[%s2 + $0x8] sm:$0xff]
  %v42 = vld [vmem:[%s2 + $0x10] sm:$0xff]
  %v43 = vld [vmem:[%s2 + $0x18] sm:$0xff]
  %v44 = vld [vmem:[%s3] sm:$0x1]
  %v45 = vld [vmem:[%s0] sm:$0xff]
  %v46 = vld [vmem:[%s0 + $0x8] sm:$0xff]
  %v47 = vld [vmem:[%s0 + $0x10] sm:$0xff]
  %v48 = vld [vmem:[%s0 + $0x18] sm:$0xff]
  %v49 = vld [vmem:[%s0 + $0x20] sm:$0xff]
  %v50 = vld [vmem:[%s0 + $0x28] sm:$0xff]
  %v51 = vld [vmem:[%s0 + $0x30] sm:$0xff]
  %v52 = vld [vmem:[%s0 + $0x38] sm:$0xff]
  %v54 = vlaneseq
  %v55 = vshrl.u32 %v54, 7
  %v56 = vsub.s32 0, %v55
  %v57 = vrot.slane %v44, %v56
  %vm59 = vcmask 31744
  %v61 = vsel %vm59, %v45, 0
  %v64 = vsel %vm59, %v46, 0
  %v67 = vsel %vm59, %v47, 0
  %v70 = vsel %vm59, %v48, 0
  %v73 = vsel %vm59, %v49, 0
  %v76 = vsel %vm59, %v50, 0
  %v79 = vsel %vm59, %v51, 0
  %v82 = vsel %vm59, %v52, 0
  %vm84 = vcmask 1043456
  %v86 = vsel %vm84, %v39, 0
  %88 = vmatprep.subr.mxu0 0.0
  %89 = vmatpush1.msra.mxu0 %v86
  %90 = vmatprep.subr.mxu0 0.0
  %91 = vmatpush1.msra.mxu0 0.0
  %92 = vmatprep.subr.mxu0 0.0
  %93 = vmatpush1.msra.mxu0 0.0
  %94 = vmatprep.subr.mxu0 0.0
  %95 = vmatpush1.msra.mxu0 0.0
  %96 = vmatprep.subr.mxu0 0.0
  %97 = vmatpush1.msra.mxu0 0.0
  %98 = vmatprep.subr.mxu0 0.0
  %99 = vmatpush1.msra.mxu0 0.0
  %100 = vmatprep.subr.mxu0 0.0
  %101 = vmatpush1.msra.mxu0 0.0
  %102 = vmatprep.subr.mxu0 0.0
  %103 = vmatpush1.msra.mxu0 0.0
  %104 = vmatprep.subr.mxu0 0.0
  %105 = vmatpush1.msra.mxu0 0.0
  %106 = vmatprep.subr.mxu0 0.0
  %107 = vmatpush1.msra.mxu0 0.0
  %108 = vmatprep.subr.mxu0 0.0
  %109 = vmatpush1.msra.mxu0 0.0
  %110 = vmatprep.subr.mxu0 0.0
  %111 = vmatpush1.msra.mxu0 0.0
  %112 = vmatprep.subr.mxu0 0.0
  %113 = vmatpush1.msra.mxu0 0.0
  %114 = vmatprep.subr.mxu0 0.0
  %115 = vmatpush1.msra.mxu0 0.0
  %116 = vmatprep.subr.mxu0 0.0
  %117 = vmatpush1.msra.mxu0 0.0
  %118 = vmatprep.subr.mxu0 0.0
  %119 = vmatpush1.msra.mxu0 0.0
  %120 = vmatprep.subr.mxu0 0.0
  %121 = vmatpush1.msra.mxu0 0.0
  %122 = vmatprep.subr.mxu0 0.0
  %123 = vmatpush1.msra.mxu0 0.0
  %124 = vmatprep.subr.mxu0 0.0
  %125 = vmatpush1.msra.mxu0 0.0
  %126 = vmatprep.subr.mxu0 0.0
  %127 = vmatpush1.msra.mxu0 0.0
  %128 = vmatprep.subr.mxu0 0.0
  %129 = vmatpush1.msra.mxu0 0.0
  %130 = vmatprep.subr.mxu0 0.0
  %131 = vmatpush1.msra.mxu0 0.0
  %132 = vmatprep.subr.mxu0 0.0
  %133 = vmatpush1.msra.mxu0 0.0
  %134 = vmatprep.subr.mxu0 0.0
  %135 = vmatpush1.msra.mxu0 0.0
  %136 = vmatprep.subr.mxu0 0.0
  %137 = vmatpush1.msra.mxu0 0.0
  %138 = vmatprep.subr.mxu0 0.0
  %139 = vmatpush1.msra.mxu0 0.0
  %140 = vmatprep.subr.mxu0 0.0
  %141 = vmatpush1.msra.mxu0 0.0
  %142 = vmatprep.subr.mxu0 0.0
  %143 = vmatpush1.msra.mxu0 0.0
  %144 = vmatprep.subr.mxu0 0.0
  %145 = vmatpush1.msra.mxu0 0.0
  %146 = vmatprep.subr.mxu0 0.0
  %147 = vmatpush1.msra.mxu0 0.0
  %148 = vmatprep.subr.mxu0 0.0
  %149 = vmatpush1.msra.mxu0 0.0
  %150 = vmatprep.subr.mxu0 0.0
  %151 = vmatpush1.msra.mxu0 0.0
  %152 = vmatprep.mubr.f32.mxu0 0.0
  %153 = vmatmul.mubr.f32.gmra.mrb[0].mxu0 %v61
  %v154 = vpop.f32.mrb[0].mxu0
  %v155 = vadd.f32 %v57, %v154
  %v156 = vpop.f32.mrb[0].mxu0
  %157 = vmatprep.mubr.f32.mxu0 0.0
  %158 = vmatmul.mubr.f32.gmra.mrb[0].mxu0 %v64
  %v159 = vpop.f32.mrb[0].mxu0
  %v160 = vadd.f32 %v57, %v159
  %v161 = vpop.f32.mrb[0].mxu0
  %162 = vmatprep.mubr.f32.mxu0 0.0
  %163 = vmatmul.mubr.f32.gmra.mrb[0].mxu0 %v67
  %v164 = vpop.f32.mrb[0].mxu0
  %v165 = vadd.f32 %v57, %v164
  %v166 = vpop.f32.mrb[0].mxu0
  %167 = vmatprep.mubr.f32.mxu0 0.0
  %168 = vmatmul.mubr.f32.gmra.mrb[0].mxu0 %v70
  %v169 = vpop.f32.mrb[0].mxu0
  %v170 = vadd.f32 %v57, %v169
  %v171 = vpop.f32.mrb[0].mxu0
  %172 = vmatprep.mubr.f32.mxu0 0.0
  %173 = vmatmul.mubr.f32.gmra.mrb[0].mxu0 %v73
  %v174 = vpop.f32.mrb[0].mxu0
  %v175 = vadd.f32 %v57, %v174
  %v176 = vpop.f32.mrb[0].mxu0
  %177 = vmatprep.mubr.f32.mxu0 0.0
  %178 = vmatmul.mubr.f32.gmra.mrb[0].mxu0 %v76
  %v179 = vpop.f32.mrb[0].mxu0
  %v180 = vadd.f32 %v57, %v179
  %v181 = vpop.f32.mrb[0].mxu0
  %182 = vmatprep.mubr.f32.mxu0 0.0
  %183 = vmatmul.mubr.f32.gmra.mrb[0].mxu0 %v79
  %v184 = vpop.f32.mrb[0].mxu0
  %v185 = vadd.f32 %v57, %v184
  %v186 = vpop.f32.mrb[0].mxu0
  %187 = vmatprep.mubr.f32.mxu0 0.0
  %188 = vmatmul.mubr.f32.gmra.mrb[0].mxu0 %v82
  %v189 = vpop.f32.mrb[0].mxu0
  %v190 = vadd.f32 %v57, %v189
  %v191 = vpop.f32.mrb[0].mxu0
  %192 = vdwg.mxu0
  %vm193 = vcmask 261120
  %v195 = vsel %vm193, 0.0, 0
  %197 = vmatprep.subr.mxu0 0.0
  %198 = vmatpush1.msra.mxu0 %v40
  %199 = vmatprep.subr.mxu0 0.0
  %200 = vmatpush1.msra.mxu0 %v41
  %201 = vmatprep.subr.mxu0 0.0
  %202 = vmatpush1.msra.mxu0 %v42
  %203 = vmatprep.subr.mxu0 0.0
  %204 = vmatpush1.msra.mxu0 %v43
  %205 = vmatprep.subr.mxu0 0.0
  %206 = vmatpush1.msra.mxu0 0.0
  %207 = vmatprep.subr.mxu0 0.0
  %208 = vmatpush1.msra.mxu0 0.0
  %209 = vmatprep.subr.mxu0 0.0
  %210 = vmatpush1.msra.mxu0 0.0
  %211 = vmatprep.subr.mxu0 0.0
  %212 = vmatpush1.msra.mxu0 0.0
  %213 = vmatprep.subr.mxu0 0.0
  %214 = vmatpush1.msra.mxu0 0.0
  %215 = vmatprep.subr.mxu0 0.0
  %216 = vmatpush1.msra.mxu0 0.0
  %217 = vmatprep.subr.mxu0 0.0
  %218 = vmatpush1.msra.mxu0 0.0
  %219 = vmatprep.subr.mxu0 0.0
  %220 = vmatpush1.msra.mxu0 0.0
  %221 = vmatprep.subr.mxu0 0.0
  %222 = vmatpush1.msra.mxu0 0.0
  %223 = vmatprep.subr.mxu0 0.0
  %224 = vmatpush1.msra.mxu0 0.0
  %225 = vmatprep.subr.mxu0 0.0
  %226 = vmatpush1.msra.mxu0 0.0
  %227 = vmatprep.subr.mxu0 0.0
  %228 = vmatpush1.msra.mxu0 0.0
  %229 = vmatprep.subr.mxu0 0.0
  %230 = vmatpush1.msra.mxu0 0.0
  %231 = vmatprep.subr.mxu0 0.0
  %232 = vmatpush1.msra.mxu0 0.0
  %233 = vmatprep.subr.mxu0 0.0
  %234 = vmatpush1.msra.mxu0 0.0
  %235 = vmatprep.subr.mxu0 0.0
  %236 = vmatpush1.msra.mxu0 0.0
  %237 = vmatprep.subr.mxu0 0.0
  %238 = vmatpush1.msra.mxu0 0.0
  %239 = vmatprep.subr.mxu0 0.0
  %240 = vmatpush1.msra.mxu0 0.0
  %241 = vmatprep.subr.mxu0 0.0
  %242 = vmatpush1.msra.mxu0 0.0
  %243 = vmatprep.subr.mxu0 0.0
  %244 = vmatpush1.msra.mxu0 0.0
  %245 = vmatprep.subr.mxu0 0.0
  %246 = vmatpush1.msra.mxu0 0.0
  %247 = vmatprep.subr.mxu0 0.0
  %248 = vmatpush1.msra.mxu0 0.0
  %249 = vmatprep.subr.mxu0 0.0
  %250 = vmatpush1.msra.mxu0 0.0
  %251 = vmatprep.subr.mxu0 0.0
  %252 = vmatpush1.msra.mxu0 0.0
  %253 = vmatprep.subr.mxu0 0.0
  %254 = vmatpush1.msra.mxu0 0.0
  %255 = vmatprep.subr.mxu0 0.0
  %256 = vmatpush1.msra.mxu0 0.0
  %257 = vmatprep.subr.mxu0 0.0
  %258 = vmatpush1.msra.mxu0 0.0
  %259 = vmatprep.subr.mxu0 0.0
  %260 = vmatpush1.msra.mxu0 0.0
  %261 = vmatprep.mubr.f32.mxu0 0.0
  %262 = vmatmul.mubr.f32.gmra.mrb[0].mxu0 %v195
  %v263 = vpop.f32.mrb[0].mxu0
  %v264 = vadd.f32 0.0, %v263
  %v265 = vpop.f32.mrb[0].mxu0
  %266 = vdwg.mxu0
  %v267 = vadd.f32 %v155, %v264
  %v268 = vmul.f32 %v267, 0.5
  %v269 = vsel %vm38, %v267, %v268
  %v270 = vtanh.pop %v269
  %v271 = vmul.f32 %v270, 0.5
  %v272 = vadd.f32 %v271, 0.5
  %v273 = vsel %vm38, %v270, %v272
  %v274 = vmul.f32 %v273, 0.0
  %276 = vrot.lane.b32.xlu0 %v273, 64
  %v277 = vpop.permute.xlu0 %276
  %v279 = vmul.f32 %v273, %v277
  %281 = vrot.lane.b32.xlu0 %v279, 32
  %v282 = vpop.permute.xlu0 %281
  %v284 = vadd.f32 %v274, %v282
  %v285 = vtanh.pop %v284
  %287 = vrot.lane.b32.xlu0 %v285, 64
  %v288 = vpop.permute.xlu0 %287
  %v290 = vmul.f32 %v273, %v288
  %292 = vrot.lane.b32.xlu0 %v290, 32
  %v293 = vpop.permute.xlu0 %292
  %295 = vst.msk [vmem:[#allocation2] sm:$0xff] %vm193, %v293
  %v296 = vsel %vm193, %v293, 0
  %298 = vmatprep.subr.mxu0 0.0
  %299 = vmatpush1.msra.mxu0 %v40
  %300 = vmatprep.subr.mxu0 0.0
  %301 = vmatpush1.msra.mxu0 %v41
  %302 = vmatprep.subr.mxu0 0.0
  %303 = vmatpush1.msra.mxu0 %v42
  %304 = vmatprep.subr.mxu0 0.0
  %305 = vmatpush1.msra.mxu0 %v43
  %306 = vmatprep.subr.mxu0 0.0
  %307 = vmatpush1.msra.mxu0 0.0
  %308 = vmatprep.subr.mxu0 0.0
  %309 = vmatpush1.msra.mxu0 0.0
  %310 = vmatprep.subr.mxu0 0.0
  %311 = vmatpush1.msra.mxu0 0.0
  %312 = vmatprep.subr.mxu0 0.0
  %313 = vmatpush1.msra.mxu0 0.0
  %314 = vmatprep.subr.mxu0 0.0
  %315 = vmatpush1.msra.mxu0 0.0
  %316 = vmatprep.subr.mxu0 0.0
  %317 = vmatpush1.msra.mxu0 0.0
  %318 = vmatprep.subr.mxu0 0.0
  %319 = vmatpush1.msra.mxu0 0.0
  %320 = vmatprep.subr.mxu0 0.0
  %321 = vmatpush1.msra.mxu0 0.0
  %322 = vmatprep.subr.mxu0 0.0
  %323 = vmatpush1.msra.mxu0 0.0
  %324 = vmatprep.subr.mxu0 0.0
  %325 = vmatpush1.msra.mxu0 0.0
  %326 = vmatprep.subr.mxu0 0.0
  %327 = vmatpush1.msra.mxu0 0.0
  %328 = vmatprep.subr.mxu0 0.0
  %329 = vmatpush1.msra.mxu0 0.0
  %330 = vmatprep.subr.mxu0 0.0
  %331 = vmatpush1.msra.mxu0 0.0
  %332 = vmatprep.subr.mxu0 0.0
  %333 = vmatpush1.msra.mxu0 0.0
  %334 = vmatprep.subr.mxu0 0.0
  %335 = vmatpush1.msra.mxu0 0.0
  %336 = vmatprep.subr.mxu0 0.0
  %337 = vmatpush1.msra.mxu0 0.0
  %338 = vmatprep.subr.mxu0 0.0
  %339 = vmatpush1.msra.mxu0 0.0
  %340 = vmatprep.subr.mxu0 0.0
  %341 = vmatpush1.msra.mxu0 0.0
  %342 = vmatprep.subr.mxu0 0.0
  %343 = vmatpush1.msra.mxu0 0.0
  %344 = vmatprep.subr.mxu0 0.0
  %345 = vmatpush1.msra.mxu0 0.0
  %346 = vmatprep.subr.mxu0 0.0
  %347 = vmatpush1.msra.mxu0 0.0
  %348 = vmatprep.subr.mxu0 0.0
  %349 = vmatpush1.msra.mxu0 0.0
  %350 = vmatprep.subr.mxu0 0.0
  %351 = vmatpush1.msra.mxu0 0.0
  %352 = vmatprep.subr.mxu0 0.0
  %353 = vmatpush1.msra.mxu0 0.0
  %354 = vmatprep.subr.mxu0 0.0
  %355 = vmatpush1.msra.mxu0 0.0
  %356 = vmatprep.subr.mxu0 0.0
  %357 = vmatpush1.msra.mxu0 0.0
  %358 = vmatprep.subr.mxu0 0.0
  %359 = vmatpush1.msra.mxu0 0.0
  %360 = vmatprep.subr.mxu0 0.0
  %361 = vmatpush1.msra.mxu0 0.0
  %362 = vmatprep.mubr.f32.mxu0 0.0
  %363 = vmatmul.mubr.f32.gmra.mrb[0].mxu0 %v296
  %v364 = vpop.f32.mrb[0].mxu0
  %v365 = vadd.f32 0.0, %v364
  %v366 = vpop.f32.mrb[0].mxu0
  %367 = vdwg.mxu0
  %v368 = vadd.f32 %v160, %v365
  %v369 = vmul.f32 %v368, 0.5
  %v370 = vsel %vm38, %v368, %v369
  %v371 = vtanh.pop %v370
  %v372 = vmul.f32 %v371, 0.5
  %v373 = vadd.f32 %v372, 0.5
  %v374 = vsel %vm38, %v371, %v373
  %v375 = vmul.f32 %v374, %v284
  %377 = vrot.lane.b32.xlu0 %v374, 64
  %v378 = vpop.permute.xlu0 %377
  %v380 = vmul.f32 %v374, %v378
  %382 = vrot.lane.b32.xlu0 %v380, 32
  %v383 = vpop.permute.xlu0 %382
  %v385 = vadd.f32 %v375, %v383
  %v386 = vtanh.pop %v385
  %388 = vrot.lane.b32.xlu0 %v386, 64
  %v389 = vpop.permute.xlu0 %388
  %v391 = vmul.f32 %v374, %v389
  %393 = vrot.lane.b32.xlu0 %v391, 32
  %v394 = vpop.permute.xlu0 %393
  %396 = vst.msk [vmem:[#allocation2 + $0x8] sm:$0xff] %vm193, %v394
  %v397 = vsel %vm193, %v394, 0
  %399 = vmatprep.subr.mxu0 0.0
  %400 = vmatpush1.msra.mxu0 %v40
  %401 = vmatprep.subr.mxu0 0.0
  %402 = vmatpush1.msra.mxu0 %v41
  %403 = vmatprep.subr.mxu0 0.0
  %404 = vmatpush1.msra.mxu0 %v42
  %405 = vmatprep.subr.mxu0 0.0
  %406 = vmatpush1.msra.mxu0 %v43
  %407 = vmatprep.subr.mxu0 0.0
  %408 = vmatpush1.msra.mxu0 0.0
  %409 = vmatprep.subr.mxu0 0.0
  %410 = vmatpush1.msra.mxu0 0.0
  %411 = vmatprep.subr.mxu0 0.0
  %412 = vmatpush1.msra.mxu0 0.0
  %413 = vmatprep.subr.mxu0 0.0
  %414 = vmatpush1.msra.mxu0 0.0
  %415 = vmatprep.subr.mxu0 0.0
  %416 = vmatpush1.msra.mxu0 0.0
  %417 = vmatprep.subr.mxu0 0.0
  %418 = vmatpush1.msra.mxu0 0.0
  %419 = vmatprep.subr.mxu0 0.0
  %420 = vmatpush1.msra.mxu0 0.0
  %421 = vmatprep.subr.mxu0 0.0
  %422 = vmatpush1.msra.mxu0 0.0
  %423 = vmatprep.subr.mxu0 0.0
  %424 = vmatpush1.msra.mxu0 0.0
  %425 = vmatprep.subr.mxu0 0.0
  %426 = vmatpush1.msra.mxu0 0.0
  %427 = vmatprep.subr.mxu0 0.0
  %428 = vmatpush1.msra.mxu0 0.0
  %429 = vmatprep.subr.mxu0 0.0
  %430 = vmatpush1.msra.mxu0 0.0
  %431 = vmatprep.subr.mxu0 0.0
  %432 = vmatpush1.msra.mxu0 0.0
  %433 = vmatprep.subr.mxu0 0.0
  %434 = vmatpush1.msra.mxu0 0.0
  %435 = vmatprep.subr.mxu0 0.0
  %436 = vmatpush1.msra.mxu0 0.0
  %437 = vmatprep.subr.mxu0 0.0
  %438 = vmatpush1.msra.mxu0 0.0
  %439 = vmatprep.subr.mxu0 0.0
  %440 = vmatpush1.msra.mxu0 0.0
  %441 = vmatprep.subr.mxu0 0.0
  %442 = vmatpush1.msra.mxu0 0.0
  %443 = vmatprep.subr.mxu0 0.0
  %444 = vmatpush1.msra.mxu0 0.0
  %445 = vmatprep.subr.mxu0 0.0
  %446 = vmatpush1.msra.mxu0 0.0
  %447 = vmatprep.subr.mxu0 0.0
  %448 = vmatpush1.msra.mxu0 0.0
  %449 = vmatprep.subr.mxu0 0.0
  %450 = vmatpush1.msra.mxu0 0.0
  %451 = vmatprep.subr.mxu0 0.0
  %452 = vmatpush1.msra.mxu0 0.0
  %453 = vmatprep.subr.mxu0 0.0
  %454 = vmatpush1.msra.mxu0 0.0
  %455 = vmatprep.subr.mxu0 0.0
  %456 = vmatpush1.msra.mxu0 0.0
  %457 = vmatprep.subr.mxu0 0.0
  %458 = vmatpush1.msra.mxu0 0.0
  %459 = vmatprep.subr.mxu0 0.0
  %460 = vmatpush1.msra.mxu0 0.0
  %461 = vmatprep.subr.mxu0 0.0
  %462 = vmatpush1.msra.mxu0 0.0
  %463 = vmatprep.mubr.f32.mxu0 0.0
  %464 = vmatmul.mubr.f32.gmra.mrb[0].mxu0 %v397
  %v465 = vpop.f32.mrb[0].mxu0
  %v466 = vadd.f32 0.0, %v465
  %v467 = vpop.f32.mrb[0].mxu0
  %468 = vdwg.mxu0
  %v469 = vadd.f32 %v165, %v466
  %v470 = vmul.f32 %v469, 0.5
  %v471 = vsel %vm38, %v469, %v470
  %v472 = vtanh.pop %v471
  %v473 = vmul.f32 %v472, 0.5
  %v474 = vadd.f32 %v473, 0.5
  %v475 = vsel %vm38, %v472, %v474
  %v476 = vmul.f32 %v475, %v385
  %478 = vrot.lane.b32.xlu0 %v475, 64
  %v479 = vpop.permute.xlu0 %478
  %v481 = vmul.f32 %v475, %v479
  %483 = vrot.lane.b32.xlu0 %v481, 32
  %v484 = vpop.permute.xlu0 %483
  %v486 = vadd.f32 %v476, %v484
  %v487 = vtanh.pop %v486
  %489 = vrot.lane.b32.xlu0 %v487, 64
  %v490 = vpop.permute.xlu0 %489
  %v492 = vmul.f32 %v475, %v490
  %494 = vrot.lane.b32.xlu0 %v492, 32
  %v495 = vpop.permute.xlu0 %494
  %497 = vst.msk [vmem:[#allocation2 + $0x10] sm:$0xff] %vm193, %v495
  %v498 = vsel %vm193, %v495, 0
  %500 = vmatprep.subr.mxu0 0.0
  %501 = vmatpush1.msra.mxu0 %v40
  %502 = vmatprep.subr.mxu0 0.0
  %503 = vmatpush1.msra.mxu0 %v41
  %504 = vmatprep.subr.mxu0 0.0
  %505 = vmatpush1.msra.mxu0 %v42
  %506 = vmatprep.subr.mxu0 0.0
  %507 = vmatpush1.msra.mxu0 %v43
  %508 = vmatprep.subr.mxu0 0.0
  %509 = vmatpush1.msra.mxu0 0.0
  %510 = vmatprep.subr.mxu0 0.0
  %511 = vmatpush1.msra.mxu0 0.0
  %512 = vmatprep.subr.mxu0 0.0
  %513 = vmatpush1.msra.mxu0 0.0
  %514 = vmatprep.subr.mxu0 0.0
  %515 = vmatpush1.msra.mxu0 0.0
  %516 = vmatprep.subr.mxu0 0.0
  %517 = vmatpush1.msra.mxu0 0.0
  %518 = vmatprep.subr.mxu0 0.0
  %519 = vmatpush1.msra.mxu0 0.0
  %520 = vmatprep.subr.mxu0 0.0
  %521 = vmatpush1.msra.mxu0 0.0
  %522 = vmatprep.subr.mxu0 0.0
  %523 = vmatpush1.msra.mxu0 0.0
  %524 = vmatprep.subr.mxu0 0.0
  %525 = vmatpush1.msra.mxu0 0.0
  %526 = vmatprep.subr.mxu0 0.0
  %527 = vmatpush1.msra.mxu0 0.0
  %528 = vmatprep.subr.mxu0 0.0
  %529 = vmatpush1.msra.mxu0 0.0
  %530 = vmatprep.subr.mxu0 0.0
  %531 = vmatpush1.msra.mxu0 0.0
  %532 = vmatprep.subr.mxu0 0.0
  %533 = vmatpush1.msra.mxu0 0.0
  %534 = vmatprep.subr.mxu0 0.0
  %535 = vmatpush1.msra.mxu0 0.0
  %536 = vmatprep.subr.mxu0 0.0
  %537 = vmatpush1.msra.mxu0 0.0
  %538 = vmatprep.subr.mxu0 0.0
  %539 = vmatpush1.msra.mxu0 0.0
  %540 = vmatprep.subr.mxu0 0.0
  %541 = vmatpush1.msra.mxu0 0.0
  %542 = vmatprep.subr.mxu0 0.0
  %543 = vmatpush1.msra.mxu0 0.0
  %544 = vmatprep.subr.mxu0 0.0
  %545 = vmatpush1.msra.mxu0 0.0
  %546 = vmatprep.subr.mxu0 0.0
  %547 = vmatpush1.msra.mxu0 0.0
  %548 = vmatprep.subr.mxu0 0.0
  %549 = vmatpush1.msra.mxu0 0.0
  %550 = vmatprep.subr.mxu0 0.0
  %551 = vmatpush1.msra.mxu0 0.0
  %552 = vmatprep.subr.mxu0 0.0
  %553 = vmatpush1.msra.mxu0 0.0
  %554 = vmatprep.subr.mxu0 0.0
  %555 = vmatpush1.msra.mxu0 0.0
  %556 = vmatprep.subr.mxu0 0.0
  %557 = vmatpush1.msra.mxu0 0.0
  %558 = vmatprep.subr.mxu0 0.0
  %559 = vmatpush1.msra.mxu0 0.0
  %560 = vmatprep.subr.mxu0 0.0
  %561 = vmatpush1.msra.mxu0 0.0
  %562 = vmatprep.subr.mxu0 0.0
  %563 = vmatpush1.msra.mxu0 0.0
  %564 = vmatprep.mubr.f32.mxu0 0.0
  %565 = vmatmul.mubr.f32.gmra.mrb[0].mxu0 %v498
  %v566 = vpop.f32.mrb[0].mxu0
  %v567 = vadd.f32 0.0, %v566
  %v568 = vpop.f32.mrb[0].mxu0
  %569 = vdwg.mxu0
  %v570 = vadd.f32 %v170, %v567
  %v571 = vmul.f32 %v570, 0.5
  %v572 = vsel %vm38, %v570, %v571
  %v573 = vtanh.pop %v572
  %v574 = vmul.f32 %v573, 0.5
  %v575 = vadd.f32 %v574, 0.5
  %v576 = vsel %vm38, %v573, %v575
  %v577 = vmul.f32 %v576, %v486
  %579 = vrot.lane.b32.xlu0 %v576, 64
  %v580 = vpop.permute.xlu0 %579
  %v582 = vmul.f32 %v576, %v580
  %584 = vrot.lane.b32.xlu0 %v582, 32
  %v585 = vpop.permute.xlu0 %584
  %v587 = vadd.f32 %v577, %v585
  %v588 = vtanh.pop %v587
  %590 = vrot.lane.b32.xlu0 %v588, 64
  %v591 = vpop.permute.xlu0 %590
  %v593 = vmul.f32 %v576, %v591
  %595 = vrot.lane.b32.xlu0 %v593, 32
  %v596 = vpop.permute.xlu0 %595
  %598 = vst.msk [vmem:[#allocation2 + $0x18] sm:$0xff] %vm193, %v596
  %v599 = vsel %vm193, %v596, 0
  %601 = vmatprep.subr.mxu0 0.0
  %602 = vmatpush1.msra.mxu0 %v40
  %603 = vmatprep.subr.mxu0 0.0
  %604 = vmatpush1.msra.mxu0 %v41
  %605 = vmatprep.subr.mxu0 0.0
  %606 = vmatpush1.msra.mxu0 %v42
  %607 = vmatprep.subr.mxu0 0.0
  %608 = vmatpush1.msra.mxu0 %v43
  %609 = vmatprep.subr.mxu0 0.0
  %610 = vmatpush1.msra.mxu0 0.0
  %611 = vmatprep.subr.mxu0 0.0
  %612 = vmatpush1.msra.mxu0 0.0
  %613 = vmatprep.subr.mxu0 0.0
  %614 = vmatpush1.msra.mxu0 0.0
  %615 = vmatprep.subr.mxu0 0.0
  %616 = vmatpush1.msra.mxu0 0.0
  %617 = vmatprep.subr.mxu0 0.0
  %618 = vmatpush1.msra.mxu0 0.0
  %619 = vmatprep.subr.mxu0 0.0
  %620 = vmatpush1.msra.mxu0 0.0
  %621 = vmatprep.subr.mxu0 0.0
  %622 = vmatpush1.msra.mxu0 0.0
  %623 = vmatprep.subr.mxu0 0.0
  %624 = vmatpush1.msra.mxu0 0.0
  %625 = vmatprep.subr.mxu0 0.0
  %626 = vmatpush1.msra.mxu0 0.0
  %627 = vmatprep.subr.mxu0 0.0
  %628 = vmatpush1.msra.mxu0 0.0
  %629 = vmatprep.subr.mxu0 0.0
  %630 = vmatpush1.msra.mxu0 0.0
  %631 = vmatprep.subr.mxu0 0.0
  %632 = vmatpush1.msra.mxu0 0.0
  %633 = vmatprep.subr.mxu0 0.0
  %634 = vmatpush1.msra.mxu0 0.0
  %635 = vmatprep.subr.mxu0 0.0
  %636 = vmatpush1.msra.mxu0 0.0
  %637 = vmatprep.subr.mxu0 0.0
  %638 = vmatpush1.msra.mxu0 0.0
  %639 = vmatprep.subr.mxu0 0.0
  %640 = vmatpush1.msra.mxu0 0.0
  %641 = vmatprep.subr.mxu0 0.0
  %642 = vmatpush1.msra.mxu0 0.0
  %643 = vmatprep.subr.mxu0 0.0
  %644 = vmatpush1.msra.mxu0 0.0
  %645 = vmatprep.subr.mxu0 0.0
  %646 = vmatpush1.msra.mxu0 0.0
  %647 = vmatprep.subr.mxu0 0.0
  %648 = vmatpush1.msra.mxu0 0.0
  %649 = vmatprep.subr.mxu0 0.0
  %650 = vmatpush1.msra.mxu0 0.0
  %651 = vmatprep.subr.mxu0 0.0
  %652 = vmatpush1.msra.mxu0 0.0
  %653 = vmatprep.subr.mxu0 0.0
  %654 = vmatpush1.msra.mxu0 0.0
  %655 = vmatprep.subr.mxu0 0.0
  %656 = vmatpush1.msra.mxu0 0.0
  %657 = vmatprep.subr.mxu0 0.0
  %658 = vmatpush1.msra.mxu0 0.0
  %659 = vmatprep.subr.mxu0 0.0
  %660 = vmatpush1.msra.mxu0 0.0
  %661 = vmatprep.subr.mxu0 0.0
  %662 = vmatpush1.msra.mxu0 0.0
  %663 = vmatprep.subr.mxu0 0.0
  %664 = vmatpush1.msra.mxu0 0.0
  %665 = vmatprep.mubr.f32.mxu0 0.0
  %666 = vmatmul.mubr.f32.gmra.mrb[0].mxu0 %v599
  %v667 = vpop.f32.mrb[0].mxu0
  %v668 = vadd.f32 0.0, %v667
  %v669 = vpop.f32.mrb[0].mxu0
  %670 = vdwg.mxu0
  %v671 = vadd.f32 %v175, %v668
  %v672 = vmul.f32 %v671, 0.5
  %v673 = vsel %vm38, %v671, %v672
  %v674 = vtanh.pop %v673
  %v675 = vmul.f32 %v674, 0.5
  %v676 = vadd.f32 %v675, 0.5
  %v677 = vsel %vm38, %v674, %v676
  %v678 = vmul.f32 %v677, %v587
  %680 = vrot.lane.b32.xlu0 %v677, 64
  %v681 = vpop.permute.xlu0 %680
  %v683 = vmul.f32 %v677, %v681
  %685 = vrot.lane.b32.xlu0 %v683, 32
  %v686 = vpop.permute.xlu0 %685
  %v688 = vadd.f32 %v678, %v686
  %v689 = vtanh.pop %v688
  %691 = vrot.lane.b32.xlu0 %v689, 64
  %v692 = vpop.permute.xlu0 %691
  %v694 = vmul.f32 %v677, %v692
  %696 = vrot.lane.b32.xlu0 %v694, 32
  %v697 = vpop.permute.xlu0 %696
  %699 = vst.msk [vmem:[#allocation2 + $0x20] sm:$0xff] %vm193, %v697
  %v700 = vsel %vm193, %v697, 0
  %702 = vmatprep.subr.mxu0 0.0
  %703 = vmatpush1.msra.mxu0 %v40
  %704 = vmatprep.subr.mxu0 0.0
  %705 = vmatpush1.msra.mxu0 %v41
  %706 = vmatprep.subr.mxu0 0.0
  %707 = vmatpush1.msra.mxu0 %v42
  %708 = vmatprep.subr.mxu0 0.0
  %709 = vmatpush1.msra.mxu0 %v43
  %710 = vmatprep.subr.mxu0 0.0
  %711 = vmatpush1.msra.mxu0 0.0
  %712 = vmatprep.subr.mxu0 0.0
  %713 = vmatpush1.msra.mxu0 0.0
  %714 = vmatprep.subr.mxu0 0.0
  %715 = vmatpush1.msra.mxu0 0.0
  %716 = vmatprep.subr.mxu0 0.0
  %717 = vmatpush1.msra.mxu0 0.0
  %718 = vmatprep.subr.mxu0 0.0
  %719 = vmatpush1.msra.mxu0 0.0
  %720 = vmatprep.subr.mxu0 0.0
  %721 = vmatpush1.msra.mxu0 0.0
  %722 = vmatprep.subr.mxu0 0.0
  %723 = vmatpush1.msra.mxu0 0.0
  %724 = vmatprep.subr.mxu0 0.0
  %725 = vmatpush1.msra.mxu0 0.0
  %726 = vmatprep.subr.mxu0 0.0
  %727 = vmatpush1.msra.mxu0 0.0
  %728 = vmatprep.subr.mxu0 0.0
  %729 = vmatpush1.msra.mxu0 0.0
  %730 = vmatprep.subr.mxu0 0.0
  %731 = vmatpush1.msra.mxu0 0.0
  %732 = vmatprep.subr.mxu0 0.0
  %733 = vmatpush1.msra.mxu0 0.0
  %734 = vmatprep.subr.mxu0 0.0
  %735 = vmatpush1.msra.mxu0 0.0
  %736 = vmatprep.subr.mxu0 0.0
  %737 = vmatpush1.msra.mxu0 0.0
  %738 = vmatprep.subr.mxu0 0.0
  %739 = vmatpush1.msra.mxu0 0.0
  %740 = vmatprep.subr.mxu0 0.0
  %741 = vmatpush1.msra.mxu0 0.0
  %742 = vmatprep.subr.mxu0 0.0
  %743 = vmatpush1.msra.mxu0 0.0
  %744 = vmatprep.subr.mxu0 0.0
  %745 = vmatpush1.msra.mxu0 0.0
  %746 = vmatprep.subr.mxu0 0.0
  %747 = vmatpush1.msra.mxu0 0.0
  %748 = vmatprep.subr.mxu0 0.0
  %749 = vmatpush1.msra.mxu0 0.0
  %750 = vmatprep.subr.mxu0 0.0
  %751 = vmatpush1.msra.mxu0 0.0
  %752 = vmatprep.subr.mxu0 0.0
  %753 = vmatpush1.msra.mxu0 0.0
  %754 = vmatprep.subr.mxu0 0.0
  %755 = vmatpush1.msra.mxu0 0.0
  %756 = vmatprep.subr.mxu0 0.0
  %757 = vmatpush1.msra.mxu0 0.0
  %758 = vmatprep.subr.mxu0 0.0
  %759 = vmatpush1.msra.mxu0 0.0
  %760 = vmatprep.subr.mxu0 0.0
  %761 = vmatpush1.msra.mxu0 0.0
  %762 = vmatprep.subr.mxu0 0.0
  %763 = vmatpush1.msra.mxu0 0.0
  %764 = vmatprep.subr.mxu0 0.0
  %765 = vmatpush1.msra.mxu0 0.0
  %766 = vmatprep.mubr.f32.mxu0 0.0
  %767 = vmatmul.mubr.f32.gmra.mrb[0].mxu0 %v700
  %v768 = vpop.f32.mrb[0].mxu0
  %v769 = vadd.f32 0.0, %v768
  %v770 = vpop.f32.mrb[0].mxu0
  %771 = vdwg.mxu0
  %v772 = vadd.f32 %v180, %v769
  %v773 = vmul.f32 %v772, 0.5
  %v774 = vsel %vm38, %v772, %v773
  %v775 = vtanh.pop %v774
  %v776 = vmul.f32 %v775, 0.5
  %v777 = vadd.f32 %v776, 0.5
  %v778 = vsel %vm38, %v775, %v777
  %v779 = vmul.f32 %v778, %v688
  %781 = vrot.lane.b32.xlu0 %v778, 64
  %v782 = vpop.permute.xlu0 %781
  %v784 = vmul.f32 %v778, %v782
  %786 = vrot.lane.b32.xlu0 %v784, 32
  %v787 = vpop.permute.xlu0 %786
  %v789 = vadd.f32 %v779, %v787
  %v790 = vtanh.pop %v789
  %792 = vrot.lane.b32.xlu0 %v790, 64
  %v793 = vpop.permute.xlu0 %792
  %v795 = vmul.f32 %v778, %v793
  %797 = vrot.lane.b32.xlu0 %v795, 32
  %v798 = vpop.permute.xlu0 %797
  %800 = vst.msk [vmem:[#allocation2 + $0x28] sm:$0xff] %vm193, %v798
  %v801 = vsel %vm193, %v798, 0
  %803 = vmatprep.subr.mxu0 0.0
  %804 = vmatpush1.msra.mxu0 %v40
  %805 = vmatprep.subr.mxu0 0.0
  %806 = vmatpush1.msra.mxu0 %v41
  %807 = vmatprep.subr.mxu0 0.0
  %808 = vmatpush1.msra.mxu0 %v42
  %809 = vmatprep.subr.mxu0 0.0
  %810 = vmatpush1.msra.mxu0 %v43
  %811 = vmatprep.subr.mxu0 0.0
  %812 = vmatpush1.msra.mxu0 0.0
  %813 = vmatprep.subr.mxu0 0.0
  %814 = vmatpush1.msra.mxu0 0.0
  %815 = vmatprep.subr.mxu0 0.0
  %816 = vmatpush1.msra.mxu0 0.0
  %817 = vmatprep.subr.mxu0 0.0
  %818 = vmatpush1.msra.mxu0 0.0
  %819 = vmatprep.subr.mxu0 0.0
  %820 = vmatpush1.msra.mxu0 0.0
  %821 = vmatprep.subr.mxu0 0.0
  %822 = vmatpush1.msra.mxu0 0.0
  %823 = vmatprep.subr.mxu0 0.0
  %824 = vmatpush1.msra.mxu0 0.0
  %825 = vmatprep.subr.mxu0 0.0
  %826 = vmatpush1.msra.mxu0 0.0
  %827 = vmatprep.subr.mxu0 0.0
  %828 = vmatpush1.msra.mxu0 0.0
  %829 = vmatprep.subr.mxu0 0.0
  %830 = vmatpush1.msra.mxu0 0.0
  %831 = vmatprep.subr.mxu0 0.0
  %832 = vmatpush1.msra.mxu0 0.0
  %833 = vmatprep.subr.mxu0 0.0
  %834 = vmatpush1.msra.mxu0 0.0
  %835 = vmatprep.subr.mxu0 0.0
  %836 = vmatpush1.msra.mxu0 0.0
  %837 = vmatprep.subr.mxu0 0.0
  %838 = vmatpush1.msra.mxu0 0.0
  %839 = vmatprep.subr.mxu0 0.0
  %840 = vmatpush1.msra.mxu0 0.0
  %841 = vmatprep.subr.mxu0 0.0
  %842 = vmatpush1.msra.mxu0 0.0
  %843 = vmatprep.subr.mxu0 0.0
  %844 = vmatpush1.msra.mxu0 0.0
  %845 = vmatprep.subr.mxu0 0.0
  %846 = vmatpush1.msra.mxu0 0.0
  %847 = vmatprep.subr.mxu0 0.0
  %848 = vmatpush1.msra.mxu0 0.0
  %849 = vmatprep.subr.mxu0 0.0
  %850 = vmatpush1.msra.mxu0 0.0
  %851 = vmatprep.subr.mxu0 0.0
  %852 = vmatpush1.msra.mxu0 0.0
  %853 = vmatprep.subr.mxu0 0.0
  %854 = vmatpush1.msra.mxu0 0.0
  %855 = vmatprep.subr.mxu0 0.0
  %856 = vmatpush1.msra.mxu0 0.0
  %857 = vmatprep.subr.mxu0 0.0
  %858 = vmatpush1.msra.mxu0 0.0
  %859 = vmatprep.subr.mxu0 0.0
  %860 = vmatpush1.msra.mxu0 0.0
  %861 = vmatprep.subr.mxu0 0.0
  %862 = vmatpush1.msra.mxu0 0.0
  %863 = vmatprep.subr.mxu0 0.0
  %864 = vmatpush1.msra.mxu0 0.0
  %865 = vmatprep.subr.mxu0 0.0
  %866 = vmatpush1.msra.mxu0 0.0
  %867 = vmatprep.mubr.f32.mxu0 0.0
  %868 = vmatmul.mubr.f32.gmra.mrb[0].mxu0 %v801
  %v869 = vpop.f32.mrb[0].mxu0
  %v870 = vadd.f32 0.0, %v869
  %v871 = vpop.f32.mrb[0].mxu0
  %872 = vdwg.mxu0
  %v873 = vadd.f32 %v185, %v870
  %v874 = vmul.f32 %v873, 0.5
  %v875 = vsel %vm38, %v873, %v874
  %v876 = vtanh.pop %v875
  %v877 = vmul.f32 %v876, 0.5
  %v878 = vadd.f32 %v877, 0.5
  %v879 = vsel %vm38, %v876, %v878
  %v880 = vmul.f32 %v879, %v789
  %882 = vrot.lane.b32.xlu0 %v879, 64
  %v883 = vpop.permute.xlu0 %882
  %v885 = vmul.f32 %v879, %v883
  %887 = vrot.lane.b32.xlu0 %v885, 32
  %v888 = vpop.permute.xlu0 %887
  %v890 = vadd.f32 %v880, %v888
  %v891 = vtanh.pop %v890
  %893 = vrot.lane.b32.xlu0 %v891, 64
  %v894 = vpop.permute.xlu0 %893
  %v896 = vmul.f32 %v879, %v894
  %898 = vrot.lane.b32.xlu0 %v896, 32
  %v899 = vpop.permute.xlu0 %898
  %901 = vst.msk [vmem:[#allocation2 + $0x30] sm:$0xff] %vm193, %v899
  %v902 = vsel %vm193, %v899, 0
  %904 = vmatprep.subr.mxu0 0.0
  %905 = vmatpush1.msra.mxu0 %v40
  %906 = vmatprep.subr.mxu0 0.0
  %907 = vmatpush1.msra.mxu0 %v41
  %908 = vmatprep.subr.mxu0 0.0
  %909 = vmatpush1.msra.mxu0 %v42
  %910 = vmatprep.subr.mxu0 0.0
  %911 = vmatpush1.msra.mxu0 %v43
  %912 = vmatprep.subr.mxu0 0.0
  %913 = vmatpush1.msra.mxu0 0.0
  %914 = vmatprep.subr.mxu0 0.0
  %915 = vmatpush1.msra.mxu0 0.0
  %916 = vmatprep.subr.mxu0 0.0
  %917 = vmatpush1.msra.mxu0 0.0
  %918 = vmatprep.subr.mxu0 0.0
  %919 = vmatpush1.msra.mxu0 0.0
  %920 = vmatprep.subr.mxu0 0.0
  %921 = vmatpush1.msra.mxu0 0.0
  %922 = vmatprep.subr.mxu0 0.0
  %923 = vmatpush1.msra.mxu0 0.0
  %924 = vmatprep.subr.mxu0 0.0
  %925 = vmatpush1.msra.mxu0 0.0
  %926 = vmatprep.subr.mxu0 0.0
  %927 = vmatpush1.msra.mxu0 0.0
  %928 = vmatprep.subr.mxu0 0.0
  %929 = vmatpush1.msra.mxu0 0.0
  %930 = vmatprep.subr.mxu0 0.0
  %931 = vmatpush1.msra.mxu0 0.0
  %932 = vmatprep.subr.mxu0 0.0
  %933 = vmatpush1.msra.mxu0 0.0
  %934 = vmatprep.subr.mxu0 0.0
  %935 = vmatpush1.msra.mxu0 0.0
  %936 = vmatprep.subr.mxu0 0.0
  %937 = vmatpush1.msra.mxu0 0.0
  %938 = vmatprep.subr.mxu0 0.0
  %939 = vmatpush1.msra.mxu0 0.0
  %940 = vmatprep.subr.mxu0 0.0
  %941 = vmatpush1.msra.mxu0 0.0
  %942 = vmatprep.subr.mxu0 0.0
  %943 = vmatpush1.msra.mxu0 0.0
  %944 = vmatprep.subr.mxu0 0.0
  %945 = vmatpush1.msra.mxu0 0.0
  %946 = vmatprep.subr.mxu0 0.0
  %947 = vmatpush1.msra.mxu0 0.0
  %948 = vmatprep.subr.mxu0 0.0
  %949 = vmatpush1.msra.mxu0 0.0
  %950 = vmatprep.subr.mxu0 0.0
  %951 = vmatpush1.msra.mxu0 0.0
  %952 = vmatprep.subr.mxu0 0.0
  %953 = vmatpush1.msra.mxu0 0.0
  %954 = vmatprep.subr.mxu0 0.0
  %955 = vmatpush1.msra.mxu0 0.0
  %956 = vmatprep.subr.mxu0 0.0
  %957 = vmatpush1.msra.mxu0 0.0
  %958 = vmatprep.subr.mxu0 0.0
  %959 = vmatpush1.msra.mxu0 0.0
  %960 = vmatprep.subr.mxu0 0.0
  %961 = vmatpush1.msra.mxu0 0.0
  %962 = vmatprep.subr.mxu0 0.0
  %963 = vmatpush1.msra.mxu0 0.0
  %964 = vmatprep.subr.mxu0 0.0
  %965 = vmatpush1.msra.mxu0 0.0
  %966 = vmatprep.subr.mxu0 0.0
  %967 = vmatpush1.msra.mxu0 0.0
  %968 = vmatprep.mubr.f32.mxu0 0.0
  %969 = vmatmul.mubr.f32.gmra.mrb[0].mxu0 %v902
  %v970 = vpop.f32.mrb[0].mxu0
  %v971 = vadd.f32 0.0, %v970
  %v972 = vpop.f32.mrb[0].mxu0
  %973 = vdwg.mxu0
  %v974 = vadd.f32 %v190, %v971
  %v975 = vmul.f32 %v974, 0.5
  %v976 = vsel %vm38, %v974, %v975
  %v977 = vtanh.pop %v976
  %v978 = vmul.f32 %v977, 0.5
  %v979 = vadd.f32 %v978, 0.5
  %v980 = vsel %vm38, %v977, %v979
  %v981 = vmul.f32 %v980, %v890
  %983 = vrot.lane.b32.xlu0 %v980, 64
  %v984 = vpop.permute.xlu0 %983
  %v986 = vmul.f32 %v980, %v984
  %988 = vrot.lane.b32.xlu0 %v986, 32
  %v989 = vpop.permute.xlu0 %988
  %v991 = vadd.f32 %v981, %v989
  %v992 = vtanh.pop %v991
  %994 = vrot.lane.b32.xlu0 %v992, 64
  %v995 = vpop.permute.xlu0 %994
  %v997 = vmul.f32 %v980, %v995
  %999 = vrot.lane.b32.xlu0 %v997, 32
  %v1000 = vpop.permute.xlu0 %999
  %1002 = vst.msk [vmem:[#allocation2 + $0x38] sm:$0xff] %vm193, %v1000
  %v1003 = vld [vmem:[%s4] sm:$0xff]
  %v1004 = vld [vmem:[%s4 + $0x8] sm:$0xff]
  %v1005 = vld [vmem:[%s4 + $0x10] sm:$0xff]
  %v1006 = vld [vmem:[%s4 + $0x18] sm:$0xff]
  %v1007 = vld [vmem:[%s5] sm:$0xff]
  %v1008 = vld [vmem:[%s5 + $0x8] sm:$0xff]
  %v1009 = vld [vmem:[%s5 + $0x10] sm:$0xff]
  %v1010 = vld [vmem:[%s5 + $0x18] sm:$0xff]
  %v1011 = vld [vmem:[%s6] sm:$0x1]
  %v1012 = vld [vmem:[#allocation2] sm:$0xff]
  %v1013 = vld [vmem:[#allocation2 + $0x8] sm:$0xff]
  %v1014 = vld [vmem:[#allocation2 + $0x10] sm:$0xff]
  %v1015 = vld [vmem:[#allocation2 + $0x18] sm:$0xff]
  %v1016 = vld [vmem:[#allocation2 + $0x20] sm:$0xff]
  %v1017 = vld [vmem:[#allocation2 + $0x28] sm:$0xff]
  %v1018 = vld [vmem:[#allocation2 + $0x30] sm:$0xff]
  %v1019 = vld [vmem:[#allocation2 + $0x38] sm:$0xff]
  %v1021 = vlaneseq
  %v1022 = vshrl.u32 %v1021, 7
  %v1023 = vsub.s32 0, %v1022
  %v1024 = vrot.slane %v1011, %v1023
  %v1027 = vsel %vm193, %v1012, 0
  %v1030 = vsel %vm193, %v1013, 0
  %v1033 = vsel %vm193, %v1014, 0
  %v1036 = vsel %vm193, %v1015, 0
  %v1039 = vsel %vm193, %v1016, 0
  %v1042 = vsel %vm193, %v1017, 0
  %v1045 = vsel %vm193, %v1018, 0
  %v1048 = vsel %vm193, %v1019, 0
  %1050 = vmatprep.subr.mxu0 0.0
  %1051 = vmatpush1.msra.mxu0 %v1003
  %1052 = vmatprep.subr.mxu0 0.0
  %1053 = vmatpush1.msra.mxu0 %v1004
  %1054 = vmatprep.subr.mxu0 0.0
  %1055 = vmatpush1.msra.mxu0 %v1005
  %1056 = vmatprep.subr.mxu0 0.0
  %1057 = vmatpush1.msra.mxu0 %v1006
  %1058 = vmatprep.subr.mxu0 0.0
  %1059 = vmatpush1.msra.mxu0 0.0
  %1060 = vmatprep.subr.mxu0 0.0
  %1061 = vmatpush1.msra.mxu0 0.0
  %1062 = vmatprep.subr.mxu0 0.0
  %1063 = vmatpush1.msra.mxu0 0.0
  %1064 = vmatprep.subr.mxu0 0.0
  %1065 = vmatpush1.msra.mxu0 0.0
  %1066 = vmatprep.subr.mxu0 0.0
  %1067 = vmatpush1.msra.mxu0 0.0
  %1068 = vmatprep.subr.mxu0 0.0
  %1069 = vmatpush1.msra.mxu0 0.0
  %1070 = vmatprep.subr.mxu0 0.0
  %1071 = vmatpush1.msra.mxu0 0.0
  %1072 = vmatprep.subr.mxu0 0.0
  %1073 = vmatpush1.msra.mxu0 0.0
  %1074 = vmatprep.subr.mxu0 0.0
  %1075 = vmatpush1.msra.mxu0 0.0
  %1076 = vmatprep.subr.mxu0 0.0
  %1077 = vmatpush1.msra.mxu0 0.0
  %1078 = vmatprep.subr.mxu0 0.0
  %1079 = vmatpush1.msra.mxu0 0.0
  %1080 = vmatprep.subr.mxu0 0.0
  %1081 = vmatpush1.msra.mxu0 0.0
  %1082 = vmatprep.subr.mxu0 0.0
  %1083 = vmatpush1.msra.mxu0 0.0
  %1084 = vmatprep.subr.mxu0 0.0
  %1085 = vmatpush1.msra.mxu0 0.0
  %1086 = vmatprep.subr.mxu0 0.0
  %1087 = vmatpush1.msra.mxu0 0.0
  %1088 = vmatprep.subr.mxu0 0.0
  %1089 = vmatpush1.msra.mxu0 0.0
  %1090 = vmatprep.subr.mxu0 0.0
  %1091 = vmatpush1.msra.mxu0 0.0
  %1092 = vmatprep.subr.mxu0 0.0
  %1093 = vmatpush1.msra.mxu0 0.0
  %1094 = vmatprep.subr.mxu0 0.0
  %1095 = vmatpush1.msra.mxu0 0.0
  %1096 = vmatprep.subr.mxu0 0.0
  %1097 = vmatpush1.msra.mxu0 0.0
  %1098 = vmatprep.subr.mxu0 0.0
  %1099 = vmatpush1.msra.mxu0 0.0
  %1100 = vmatprep.subr.mxu0 0.0
  %1101 = vmatpush1.msra.mxu0 0.0
  %1102 = vmatprep.subr.mxu0 0.0
  %1103 = vmatpush1.msra.mxu0 0.0
  %1104 = vmatprep.subr.mxu0 0.0
  %1105 = vmatpush1.msra.mxu0 0.0
  %1106 = vmatprep.subr.mxu0 0.0
  %1107 = vmatpush1.msra.mxu0 0.0
  %1108 = vmatprep.subr.mxu0 0.0
  %1109 = vmatpush1.msra.mxu0 0.0
  %1110 = vmatprep.subr.mxu0 0.0
  %1111 = vmatpush1.msra.mxu0 0.0
  %1112 = vmatprep.subr.mxu0 0.0
  %1113 = vmatpush1.msra.mxu0 0.0
  %1114 = vmatprep.mubr.f32.mxu0 0.0
  %1115 = vmatmul.mubr.f32.gmra.mrb[0].mxu0 %v1027
  %v1116 = vpop.f32.mrb[0].mxu0
  %v1117 = vadd.f32 %v1024, %v1116
  %v1118 = vpop.f32.mrb[0].mxu0
  %1119 = vmatprep.mubr.f32.mxu0 0.0
  %1120 = vmatmul.mubr.f32.gmra.mrb[0].mxu0 %v1030
  %v1121 = vpop.f32.mrb[0].mxu0
  %v1122 = vadd.f32 %v1024, %v1121
  %v1123 = vpop.f32.mrb[0].mxu0
  %1124 = vmatprep.mubr.f32.mxu0 0.0
  %1125 = vmatmul.mubr.f32.gmra.mrb[0].mxu0 %v1033
  %v1126 = vpop.f32.mrb[0].mxu0
  %v1127 = vadd.f32 %v1024, %v1126
  %v1128 = vpop.f32.mrb[0].mxu0
  %1129 = vmatprep.mubr.f32.mxu0 0.0
  %1130 = vmatmul.mubr.f32.gmra.mrb[0].mxu0 %v1036
  %v1131 = vpop.f32.mrb[0].mxu0
  %v1132 = vadd.f32 %v1024, %v1131
  %v1133 = vpop.f32.mrb[0].mxu0
  %1134 = vmatprep.mubr.f32.mxu0 0.0
  %1135 = vmatmul.mubr.f32.gmra.mrb[0].mxu0 %v1039
  %v1136 = vpop.f32.mrb[0].mxu0
  %v1137 = vadd.f32 %v1024, %v1136
  %v1138 = vpop.f32.mrb[0].mxu0
  %1139 = vmatprep.mubr.f32.mxu0 0.0
  %1140 = vmatmul.mubr.f32.gmra.mrb[0].mxu0 %v1042
  %v1141 = vpop.f32.mrb[0].mxu0
  %v1142 = vadd.f32 %v1024, %v1141
  %v1143 = vpop.f32.mrb[0].mxu0
  %1144 = vmatprep.mubr.f32.mxu0 0.0
  %1145 = vmatmul.mubr.f32.gmra.mrb[0].mxu0 %v1045
  %v1146 = vpop.f32.mrb[0].mxu0
  %v1147 = vadd.f32 %v1024, %v1146
  %v1148 = vpop.f32.mrb[0].mxu0
  %1149 = vmatprep.mubr.f32.mxu0 0.0
  %1150 = vmatmul.mubr.f32.gmra.mrb[0].mxu0 %v1048
  %v1151 = vpop.f32.mrb[0].mxu0
  %v1152 = vadd.f32 %v1024, %v1151
  %v1153 = vpop.f32.mrb[0].mxu0
  %1154 = vdwg.mxu0
  %1155 = vmatprep.subr.mxu0 0.0
  %1156 = vmatpush1.msra.mxu0 %v1007
  %1157 = vmatprep.subr.mxu0 0.0
  %1158 = vmatpush1.msra.mxu0 %v1008
  %1159 = vmatprep.subr.mxu0 0.0
  %1160 = vmatpush1.msra.mxu0 %v1009
  %1161 = vmatprep.subr.mxu0 0.0
  %1162 = vmatpush1.msra.mxu0 %v1010
  %1163 = vmatprep.subr.mxu0 0.0
  %1164 = vmatpush1.msra.mxu0 0.0
  %1165 = vmatprep.subr.mxu0 0.0
  %1166 = vmatpush1.msra.mxu0 0.0
  %1167 = vmatprep.subr.mxu0 0.0
  %1168 = vmatpush1.msra.mxu0 0.0
  %1169 = vmatprep.subr.mxu0 0.0
  %1170 = vmatpush1.msra.mxu0 0.0
  %1171 = vmatprep.subr.mxu0 0.0
  %1172 = vmatpush1.msra.mxu0 0.0
  %1173 = vmatprep.subr.mxu0 0.0
  %1174 = vmatpush1.msra.mxu0 0.0
  %1175 = vmatprep.subr.mxu0 0.0
  %1176 = vmatpush1.msra.mxu0 0.0
  %1177 = vmatprep.subr.mxu0 0.0
  %1178 = vmatpush1.msra.mxu0 0.0
  %1179 = vmatprep.subr.mxu0 0.0
  %1180 = vmatpush1.msra.mxu0 0.0
  %1181 = vmatprep.subr.mxu0 0.0
  %1182 = vmatpush1.msra.mxu0 0.0
  %1183 = vmatprep.subr.mxu0 0.0
  %1184 = vmatpush1.msra.mxu0 0.0
  %1185 = vmatprep.subr.mxu0 0.0
  %1186 = vmatpush1.msra.mxu0 0.0
  %1187 = vmatprep.subr.mxu0 0.0
  %1188 = vmatpush1.msra.mxu0 0.0
  %1189 = vmatprep.subr.mxu0 0.0
  %1190 = vmatpush1.msra.mxu0 0.0
  %1191 = vmatprep.subr.mxu0 0.0
  %1192 = vmatpush1.msra.mxu0 0.0
  %1193 = vmatprep.subr.mxu0 0.0
  %1194 = vmatpush1.msra.mxu0 0.0
  %1195 = vmatprep.subr.mxu0 0.0
  %1196 = vmatpush1.msra.mxu0 0.0
  %1197 = vmatprep.subr.mxu0 0.0
  %1198 = vmatpush1.msra.mxu0 0.0
  %1199 = vmatprep.subr.mxu0 0.0
  %1200 = vmatpush1.msra.mxu0 0.0
  %1201 = vmatprep.subr.mxu0 0.0
  %1202 = vmatpush1.msra.mxu0 0.0
  %1203 = vmatprep.subr.mxu0 0.0
  %1204 = vmatpush1.msra.mxu0 0.0
  %1205 = vmatprep.subr.mxu0 0.0
  %1206 = vmatpush1.msra.mxu0 0.0
  %1207 = vmatprep.subr.mxu0 0.0
  %1208 = vmatpush1.msra.mxu0 0.0
  %1209 = vmatprep.subr.mxu0 0.0
  %1210 = vmatpush1.msra.mxu0 0.0
  %1211 = vmatprep.subr.mxu0 0.0
  %1212 = vmatpush1.msra.mxu0 0.0
  %1213 = vmatprep.subr.mxu0 0.0
  %1214 = vmatpush1.msra.mxu0 0.0
  %1215 = vmatprep.subr.mxu0 0.0
  %1216 = vmatpush1.msra.mxu0 0.0
  %1217 = vmatprep.subr.mxu0 0.0
  %1218 = vmatpush1.msra.mxu0 0.0
  %1219 = vmatprep.mubr.f32.mxu0 0.0
  %1220 = vmatmul.mubr.f32.gmra.mrb[0].mxu0 %v195
  %v1221 = vpop.f32.mrb[0].mxu0
  %v1222 = vadd.f32 0.0, %v1221
  %v1223 = vpop.f32.mrb[0].mxu0
  %1224 = vdwg.mxu0
  %v1225 = vadd.f32 %v1117, %v1222
  %v1226 = vmul.f32 %v1225, 0.5
  %v1227 = vsel %vm38, %v1225, %v1226
  %v1228 = vtanh.pop %v1227
  %v1229 = vmul.f32 %v1228, 0.5
  %v1230 = vadd.f32 %v1229, 0.5
  %v1231 = vsel %vm38, %v1228, %v1230
  %v1232 = vmul.f32 %v1231, 0.0
  %1234 = vrot.lane.b32.xlu0 %v1231, 64
  %v1235 = vpop.permute.xlu0 %1234
  %v1237 = vmul.f32 %v1231, %v1235
  %1239 = vrot.lane.b32.xlu0 %v1237, 32
  %v1240 = vpop.permute.xlu0 %1239
  %v1242 = vadd.f32 %v1232, %v1240
  %v1243 = vtanh.pop %v1242
  %1245 = vrot.lane.b32.xlu0 %v1243, 64
  %v1246 = vpop.permute.xlu0 %1245
  %v1248 = vmul.f32 %v1231, %v1246
  %1250 = vrot.lane.b32.xlu0 %v1248, 32
  %v1251 = vpop.permute.xlu0 %1250
  %v1252 = vsel %vm193, %v1251, 0
  %1254 = vmatprep.subr.mxu0 0.0
  %1255 = vmatpush1.msra.mxu0 %v1007
  %1256 = vmatprep.subr.mxu0 0.0
  %1257 = vmatpush1.msra.mxu0 %v1008
  %1258 = vmatprep.subr.mxu0 0.0
  %1259 = vmatpush1.msra.mxu0 %v1009
  %1260 = vmatprep.subr.mxu0 0.0
  %1261 = vmatpush1.msra.mxu0 %v1010
  %1262 = vmatprep.subr.mxu0 0.0
  %1263 = vmatpush1.msra.mxu0 0.0
  %1264 = vmatprep.subr.mxu0 0.0
  %1265 = vmatpush1.msra.mxu0 0.0
  %1266 = vmatprep.subr.mxu0 0.0
  %1267 = vmatpush1.msra.mxu0 0.0
  %1268 = vmatprep.subr.mxu0 0.0
  %1269 = vmatpush1.msra.mxu0 0.0
  %1270 = vmatprep.subr.mxu0 0.0
  %1271 = vmatpush1.msra.mxu0 0.0
  %1272 = vmatprep.subr.mxu0 0.0
  %1273 = vmatpush1.msra.mxu0 0.0
  %1274 = vmatprep.subr.mxu0 0.0
  %1275 = vmatpush1.msra.mxu0 0.0
  %1276 = vmatprep.subr.mxu0 0.0
  %1277 = vmatpush1.msra.mxu0 0.0
  %1278 = vmatprep.subr.mxu0 0.0
  %1279 = vmatpush1.msra.mxu0 0.0
  %1280 = vmatprep.subr.mxu0 0.0
  %1281 = vmatpush1.msra.mxu0 0.0
  %1282 = vmatprep.subr.mxu0 0.0
  %1283 = vmatpush1.msra.mxu0 0.0
  %1284 = vmatprep.subr.mxu0 0.0
  %1285 = vmatpush1.msra.mxu0 0.0
  %1286 = vmatprep.subr.mxu0 0.0
  %1287 = vmatpush1.msra.mxu0 0.0
  %1288 = vmatprep.subr.mxu0 0.0
  %1289 = vmatpush1.msra.mxu0 0.0
  %1290 = vmatprep.subr.mxu0 0.0
  %1291 = vmatpush1.msra.mxu0 0.0
  %1292 = vmatprep.subr.mxu0 0.0
  %1293 = vmatpush1.msra.mxu0 0.0
  %1294 = vmatprep.subr.mxu0 0.0
  %1295 = vmatpush1.msra.mxu0 0.0
  %1296 = vmatprep.subr.mxu0 0.0
  %1297 = vmatpush1.msra.mxu0 0.0
  %1298 = vmatprep.subr.mxu0 0.0
  %1299 = vmatpush1.msra.mxu0 0.0
  %1300 = vmatprep.subr.mxu0 0.0
  %1301 = vmatpush1.msra.mxu0 0.0
  %1302 = vmatprep.subr.mxu0 0.0
  %1303 = vmatpush1.msra.mxu0 0.0
  %1304 = vmatprep.subr.mxu0 0.0
  %1305 = vmatpush1.msra.mxu0 0.0
  %1306 = vmatprep.subr.mxu0 0.0
  %1307 = vmatpush1.msra.mxu0 0.0
  %1308 = vmatprep.subr.mxu0 0.0
  %1309 = vmatpush1.msra.mxu0 0.0
  %1310 = vmatprep.subr.mxu0 0.0
  %1311 = vmatpush1.msra.mxu0 0.0
  %1312 = vmatprep.subr.mxu0 0.0
  %1313 = vmatpush1.msra.mxu0 0.0
  %1314 = vmatprep.subr.mxu0 0.0
  %1315 = vmatpush1.msra.mxu0 0.0
  %1316 = vmatprep.subr.mxu0 0.0
  %1317 = vmatpush1.msra.mxu0 0.0
  %1318 = vmatprep.mubr.f32.mxu0 0.0
  %1319 = vmatmul.mubr.f32.gmra.mrb[0].mxu0 %v1252
  %v1320 = vpop.f32.mrb[0].mxu0
  %v1321 = vadd.f32 0.0, %v1320
  %v1322 = vpop.f32.mrb[0].mxu0
  %1323 = vdwg.mxu0
  %v1324 = vadd.f32 %v1122, %v1321
  %v1325 = vmul.f32 %v1324, 0.5
  %v1326 = vsel %vm38, %v1324, %v1325
  %v1327 = vtanh.pop %v1326
  %v1328 = vmul.f32 %v1327, 0.5
  %v1329 = vadd.f32 %v1328, 0.5
  %v1330 = vsel %vm38, %v1327, %v1329
  %v1331 = vmul.f32 %v1330, %v1242
  %1333 = vrot.lane.b32.xlu0 %v1330, 64
  %v1334 = vpop.permute.xlu0 %1333
  %v1336 = vmul.f32 %v1330, %v1334
  %1338 = vrot.lane.b32.xlu0 %v1336, 32
  %v1339 = vpop.permute.xlu0 %1338
  %v1341 = vadd.f32 %v1331, %v1339
  %v1342 = vtanh.pop %v1341
  %1344 = vrot.lane.b32.xlu0 %v1342, 64
  %v1345 = vpop.permute.xlu0 %1344
  %v1347 = vmul.f32 %v1330, %v1345
  %1349 = vrot.lane.b32.xlu0 %v1347, 32
  %v1350 = vpop.permute.xlu0 %1349
  %v1351 = vsel %vm193, %v1350, 0
  %1353 = vmatprep.subr.mxu0 0.0
  %1354 = vmatpush1.msra.mxu0 %v1007
  %1355 = vmatprep.subr.mxu0 0.0
  %1356 = vmatpush1.msra.mxu0 %v1008
  %1357 = vmatprep.subr.mxu0 0.0
  %1358 = vmatpush1.msra.mxu0 %v1009
  %1359 = vmatprep.subr.mxu0 0.0
  %1360 = vmatpush1.msra.mxu0 %v1010
  %1361 = vmatprep.subr.mxu0 0.0
  %1362 = vmatpush1.msra.mxu0 0.0
  %1363 = vmatprep.subr.mxu0 0.0
  %1364 = vmatpush1.msra.mxu0 0.0
  %1365 = vmatprep.subr.mxu0 0.0
  %1366 = vmatpush1.msra.mxu0 0.0
  %1367 = vmatprep.subr.mxu0 0.0
  %1368 = vmatpush1.msra.mxu0 0.0
  %1369 = vmatprep.subr.mxu0 0.0
  %1370 = vmatpush1.msra.mxu0 0.0
  %1371 = vmatprep.subr.mxu0 0.0
  %1372 = vmatpush1.msra.mxu0 0.0
  %1373 = vmatprep.subr.mxu0 0.0
  %1374 = vmatpush1.msra.mxu0 0.0
  %1375 = vmatprep.subr.mxu0 0.0
  %1376 = vmatpush1.msra.mxu0 0.0
  %1377 = vmatprep.subr.mxu0 0.0
  %1378 = vmatpush1.msra.mxu0 0.0
  %1379 = vmatprep.subr.mxu0 0.0
  %1380 = vmatpush1.msra.mxu0 0.0
  %1381 = vmatprep.subr.mxu0 0.0
  %1382 = vmatpush1.msra.mxu0 0.0
  %1383 = vmatprep.subr.mxu0 0.0
  %1384 = vmatpush1.msra.mxu0 0.0
  %1385 = vmatprep.subr.mxu0 0.0
  %1386 = vmatpush1.msra.mxu0 0.0
  %1387 = vmatprep.subr.mxu0 0.0
  %1388 = vmatpush1.msra.mxu0 0.0
  %1389 = vmatprep.subr.mxu0 0.0
  %1390 = vmatpush1.msra.mxu0 0.0
  %1391 = vmatprep.subr.mxu0 0.0
  %1392 = vmatpush1.msra.mxu0 0.0
  %1393 = vmatprep.subr.mxu0 0.0
  %1394 = vmatpush1.msra.mxu0 0.0
  %1395 = vmatprep.subr.mxu0 0.0
  %1396 = vmatpush1.msra.mxu0 0.0
  %1397 = vmatprep.subr.mxu0 0.0
  %1398 = vmatpush1.msra.mxu0 0.0
  %1399 = vmatprep.subr.mxu0 0.0
  %1400 = vmatpush1.msra.mxu0 0.0
  %1401 = vmatprep.subr.mxu0 0.0
  %1402 = vmatpush1.msra.mxu0 0.0
  %1403 = vmatprep.subr.mxu0 0.0
  %1404 = vmatpush1.msra.mxu0 0.0
  %1405 = vmatprep.subr.mxu0 0.0
  %1406 = vmatpush1.msra.mxu0 0.0
  %1407 = vmatprep.subr.mxu0 0.0
  %1408 = vmatpush1.msra.mxu0 0.0
  %1409 = vmatprep.subr.mxu0 0.0
  %1410 = vmatpush1.msra.mxu0 0.0
  %1411 = vmatprep.subr.mxu0 0.0
  %1412 = vmatpush1.msra.mxu0 0.0
  %1413 = vmatprep.subr.mxu0 0.0
  %1414 = vmatpush1.msra.mxu0 0.0
  %1415 = vmatprep.subr.mxu0 0.0
  %1416 = vmatpush1.msra.mxu0 0.0
  %1417 = vmatprep.mubr.f32.mxu0 0.0
  %1418 = vmatmul.mubr.f32.gmra.mrb[0].mxu0 %v1351
  %v1419 = vpop.f32.mrb[0].mxu0
  %v1420 = vadd.f32 0.0, %v1419
  %v1421 = vpop.f32.mrb[0].mxu0
  %1422 = vdwg.mxu0
  %v1423 = vadd.f32 %v1127, %v1420
  %v1424 = vmul.f32 %v1423, 0.5
  %v1425 = vsel %vm38, %v1423, %v1424
  %v1426 = vtanh.pop %v1425
  %v1427 = vmul.f32 %v1426, 0.5
  %v1428 = vadd.f32 %v1427, 0.5
  %v1429 = vsel %vm38, %v1426, %v1428
  %v1430 = vmul.f32 %v1429, %v1341
  %1432 = vrot.lane.b32.xlu0 %v1429, 64
  %v1433 = vpop.permute.xlu0 %1432
  %v1435 = vmul.f32 %v1429, %v1433
  %1437 = vrot.lane.b32.xlu0 %v1435, 32
  %v1438 = vpop.permute.xlu0 %1437
  %v1440 = vadd.f32 %v1430, %v1438
  %v1441 = vtanh.pop %v1440
  %1443 = vrot.lane.b32.xlu0 %v1441, 64
  %v1444 = vpop.permute.xlu0 %1443
  %v1446 = vmul.f32 %v1429, %v1444
  %1448 = vrot.lane.b32.xlu0 %v1446, 32
  %v1449 = vpop.permute.xlu0 %1448
  %v1450 = vsel %vm193, %v1449, 0
  %1452 = vmatprep.subr.mxu0 0.0
  %1453 = vmatpush1.msra.mxu0 %v1007
  %1454 = vmatprep.subr.mxu0 0.0
  %1455 = vmatpush1.msra.mxu0 %v1008
  %1456 = vmatprep.subr.mxu0 0.0
  %1457 = vmatpush1.msra.mxu0 %v1009
  %1458 = vmatprep.subr.mxu0 0.0
  %1459 = vmatpush1.msra.mxu0 %v1010
  %1460 = vmatprep.subr.mxu0 0.0
  %1461 = vmatpush1.msra.mxu0 0.0
  %1462 = vmatprep.subr.mxu0 0.0
  %1463 = vmatpush1.msra.mxu0 0.0
  %1464 = vmatprep.subr.mxu0 0.0
  %1465 = vmatpush1.msra.mxu0 0.0
  %1466 = vmatprep.subr.mxu0 0.0
  %1467 = vmatpush1.msra.mxu0 0.0
  %1468 = vmatprep.subr.mxu0 0.0
  %1469 = vmatpush1.msra.mxu0 0.0
  %1470 = vmatprep.subr.mxu0 0.0
  %1471 = vmatpush1.msra.mxu0 0.0
  %1472 = vmatprep.subr.mxu0 0.0
  %1473 = vmatpush1.msra.mxu0 0.0
  %1474 = vmatprep.subr.mxu0 0.0
  %1475 = vmatpush1.msra.mxu0 0.0
  %1476 = vmatprep.subr.mxu0 0.0
  %1477 = vmatpush1.msra.mxu0 0.0
  %1478 = vmatprep.subr.mxu0 0.0
  %1479 = vmatpush1.msra.mxu0 0.0
  %1480 = vmatprep.subr.mxu0 0.0
  %1481 = vmatpush1.msra.mxu0 0.0
  %1482 = vmatprep.subr.mxu0 0.0
  %1483 = vmatpush1.msra.mxu0 0.0
  %1484 = vmatprep.subr.mxu0 0.0
  %1485 = vmatpush1.msra.mxu0 0.0
  %1486 = vmatprep.subr.mxu0 0.0
  %1487 = vmatpush1.msra.mxu0 0.0
  %1488 = vmatprep.subr.mxu0 0.0
  %1489 = vmatpush1.msra.mxu0 0.0
  %1490 = vmatprep.subr.mxu0 0.0
  %1491 = vmatpush1.msra.mxu0 0.0
  %1492 = vmatprep.subr.mxu0 0.0
  %1493 = vmatpush1.msra.mxu0 0.0
  %1494 = vmatprep.subr.mxu0 0.0
  %1495 = vmatpush1.msra.mxu0 0.0
  %1496 = vmatprep.subr.mxu0 0.0
  %1497 = vmatpush1.msra.mxu0 0.0
  %1498 = vmatprep.subr.mxu0 0.0
  %1499 = vmatpush1.msra.mxu0 0.0
  %1500 = vmatprep.subr.mxu0 0.0
  %1501 = vmatpush1.msra.mxu0 0.0
  %1502 = vmatprep.subr.mxu0 0.0
  %1503 = vmatpush1.msra.mxu0 0.0
  %1504 = vmatprep.subr.mxu0 0.0
  %1505 = vmatpush1.msra.mxu0 0.0
  %1506 = vmatprep.subr.mxu0 0.0
  %1507 = vmatpush1.msra.mxu0 0.0
  %1508 = vmatprep.subr.mxu0 0.0
  %1509 = vmatpush1.msra.mxu0 0.0
  %1510 = vmatprep.subr.mxu0 0.0
  %1511 = vmatpush1.msra.mxu0 0.0
  %1512 = vmatprep.subr.mxu0 0.0
  %1513 = vmatpush1.msra.mxu0 0.0
  %1514 = vmatprep.subr.mxu0 0.0
  %1515 = vmatpush1.msra.mxu0 0.0
  %1516 = vmatprep.mubr.f32.mxu0 0.0
  %1517 = vmatmul.mubr.f32.gmra.mrb[0].mxu0 %v1450
  %v1518 = vpop.f32.mrb[0].mxu0
  %v1519 = vadd.f32 0.0, %v1518
  %v1520 = vpop.f32.mrb[0].mxu0
  %1521 = vdwg.mxu0
  %v1522 = vadd.f32 %v1132, %v1519
  %v1523 = vmul.f32 %v1522, 0.5
  %v1524 = vsel %vm38, %v1522, %v1523
  %v1525 = vtanh.pop %v1524
  %v1526 = vmul.f32 %v1525, 0.5
  %v1527 = vadd.f32 %v1526, 0.5
  %v1528 = vsel %vm38, %v1525, %v1527
  %v1529 = vmul.f32 %v1528, %v1440
  %1531 = vrot.lane.b32.xlu0 %v1528, 64
  %v1532 = vpop.permute.xlu0 %1531
  %v1534 = vmul.f32 %v1528, %v1532
  %1536 = vrot.lane.b32.xlu0 %v1534, 32
  %v1537 = vpop.permute.xlu0 %1536
  %v1539 = vadd.f32 %v1529, %v1537
  %v1540 = vtanh.pop %v1539
  %1542 = vrot.lane.b32.xlu0 %v1540, 64
  %v1543 = vpop.permute.xlu0 %1542
  %v1545 = vmul.f32 %v1528, %v1543
  %1547 = vrot.lane.b32.xlu0 %v1545, 32
  %v1548 = vpop.permute.xlu0 %1547
  %v1549 = vsel %vm193, %v1548, 0
  %1551 = vmatprep.subr.mxu0 0.0
  %1552 = vmatpush1.msra.mxu0 %v1007
  %1553 = vmatprep.subr.mxu0 0.0
  %1554 = vmatpush1.msra.mxu0 %v1008
  %1555 = vmatprep.subr.mxu0 0.0
  %1556 = vmatpush1.msra.mxu0 %v1009
  %1557 = vmatprep.subr.mxu0 0.0
  %1558 = vmatpush1.msra.mxu0 %v1010
  %1559 = vmatprep.subr.mxu0 0.0
  %1560 = vmatpush1.msra.mxu0 0.0
  %1561 = vmatprep.subr.mxu0 0.0
  %1562 = vmatpush1.msra.mxu0 0.0
  %1563 = vmatprep.subr.mxu0 0.0
  %1564 = vmatpush1.msra.mxu0 0.0
  %1565 = vmatprep.subr.mxu0 0.0
  %1566 = vmatpush1.msra.mxu0 0.0
  %1567 = vmatprep.subr.mxu0 0.0
  %1568 = vmatpush1.msra.mxu0 0.0
  %1569 = vmatprep.subr.mxu0 0.0
  %1570 = vmatpush1.msra.mxu0 0.0
  %1571 = vmatprep.subr.mxu0 0.0
  %1572 = vmatpush1.msra.mxu0 0.0
  %1573 = vmatprep.subr.mxu0 0.0
  %1574 = vmatpush1.msra.mxu0 0.0
  %1575 = vmatprep.subr.mxu0 0.0
  %1576 = vmatpush1.msra.mxu0 0.0
  %1577 = vmatprep.subr.mxu0 0.0
  %1578 = vmatpush1.msra.mxu0 0.0
  %1579 = vmatprep.subr.mxu0 0.0
  %1580 = vmatpush1.msra.mxu0 0.0
  %1581 = vmatprep.subr.mxu0 0.0
  %1582 = vmatpush1.msra.mxu0 0.0
  %1583 = vmatprep.subr.mxu0 0.0
  %1584 = vmatpush1.msra.mxu0 0.0
  %1585 = vmatprep.subr.mxu0 0.0
  %1586 = vmatpush1.msra.mxu0 0.0
  %1587 = vmatprep.subr.mxu0 0.0
  %1588 = vmatpush1.msra.mxu0 0.0
  %1589 = vmatprep.subr.mxu0 0.0
  %1590 = vmatpush1.msra.mxu0 0.0
  %1591 = vmatprep.subr.mxu0 0.0
  %1592 = vmatpush1.msra.mxu0 0.0
  %1593 = vmatprep.subr.mxu0 0.0
  %1594 = vmatpush1.msra.mxu0 0.0
  %1595 = vmatprep.subr.mxu0 0.0
  %1596 = vmatpush1.msra.mxu0 0.0
  %1597 = vmatprep.subr.mxu0 0.0
  %1598 = vmatpush1.msra.mxu0 0.0
  %1599 = vmatprep.subr.mxu0 0.0
  %1600 = vmatpush1.msra.mxu0 0.0
  %1601 = vmatprep.subr.mxu0 0.0
  %1602 = vmatpush1.msra.mxu0 0.0
  %1603 = vmatprep.subr.mxu0 0.0
  %1604 = vmatpush1.msra.mxu0 0.0
  %1605 = vmatprep.subr.mxu0 0.0
  %1606 = vmatpush1.msra.mxu0 0.0
  %1607 = vmatprep.subr.mxu0 0.0
  %1608 = vmatpush1.msra.mxu0 0.0
  %1609 = vmatprep.subr.mxu0 0.0
  %1610 = vmatpush1.msra.mxu0 0.0
  %1611 = vmatprep.subr.mxu0 0.0
  %1612 = vmatpush1.msra.mxu0 0.0
  %1613 = vmatprep.subr.mxu0 0.0
  %1614 = vmatpush1.msra.mxu0 0.0
  %1615 = vmatprep.mubr.f32.mxu0 0.0
  %1616 = vmatmul.mubr.f32.gmra.mrb[0].mxu0 %v1549
  %v1617 = vpop.f32.mrb[0].mxu0
  %v1618 = vadd.f32 0.0, %v1617
  %v1619 = vpop.f32.mrb[0].mxu0
  %1620 = vdwg.mxu0
  %v1621 = vadd.f32 %v1137, %v1618
  %v1622 = vmul.f32 %v1621, 0.5
  %v1623 = vsel %vm38, %v1621, %v1622
  %v1624 = vtanh.pop %v1623
  %v1625 = vmul.f32 %v1624, 0.5
  %v1626 = vadd.f32 %v1625, 0.5
  %v1627 = vsel %vm38, %v1624, %v1626
  %v1628 = vmul.f32 %v1627, %v1539
  %1630 = vrot.lane.b32.xlu0 %v1627, 64
  %v1631 = vpop.permute.xlu0 %1630
  %v1633 = vmul.f32 %v1627, %v1631
  %1635 = vrot.lane.b32.xlu0 %v1633, 32
  %v1636 = vpop.permute.xlu0 %1635
  %v1638 = vadd.f32 %v1628, %v1636
  %v1639 = vtanh.pop %v1638
  %1641 = vrot.lane.b32.xlu0 %v1639, 64
  %v1642 = vpop.permute.xlu0 %1641
  %v1644 = vmul.f32 %v1627, %v1642
  %1646 = vrot.lane.b32.xlu0 %v1644, 32
  %v1647 = vpop.permute.xlu0 %1646
  %v1648 = vsel %vm193, %v1647, 0
  %1650 = vmatprep.subr.mxu0 0.0
  %1651 = vmatpush1.msra.mxu0 %v1007
  %1652 = vmatprep.subr.mxu0 0.0
  %1653 = vmatpush1.msra.mxu0 %v1008
  %1654 = vmatprep.subr.mxu0 0.0
  %1655 = vmatpush1.msra.mxu0 %v1009
  %1656 = vmatprep.subr.mxu0 0.0
  %1657 = vmatpush1.msra.mxu0 %v1010
  %1658 = vmatprep.subr.mxu0 0.0
  %1659 = vmatpush1.msra.mxu0 0.0
  %1660 = vmatprep.subr.mxu0 0.0
  %1661 = vmatpush1.msra.mxu0 0.0
  %1662 = vmatprep.subr.mxu0 0.0
  %1663 = vmatpush1.msra.mxu0 0.0
  %1664 = vmatprep.subr.mxu0 0.0
  %1665 = vmatpush1.msra.mxu0 0.0
  %1666 = vmatprep.subr.mxu0 0.0
  %1667 = vmatpush1.msra.mxu0 0.0
  %1668 = vmatprep.subr.mxu0 0.0
  %1669 = vmatpush1.msra.mxu0 0.0
  %1670 = vmatprep.subr.mxu0 0.0
  %1671 = vmatpush1.msra.mxu0 0.0
  %1672 = vmatprep.subr.mxu0 0.0
  %1673 = vmatpush1.msra.mxu0 0.0
  %1674 = vmatprep.subr.mxu0 0.0
  %1675 = vmatpush1.msra.mxu0 0.0
  %1676 = vmatprep.subr.mxu0 0.0
  %1677 = vmatpush1.msra.mxu0 0.0
  %1678 = vmatprep.subr.mxu0 0.0
  %1679 = vmatpush1.msra.mxu0 0.0
  %1680 = vmatprep.subr.mxu0 0.0
  %1681 = vmatpush1.msra.mxu0 0.0
  %1682 = vmatprep.subr.mxu0 0.0
  %1683 = vmatpush1.msra.mxu0 0.0
  %1684 = vmatprep.subr.mxu0 0.0
  %1685 = vmatpush1.msra.mxu0 0.0
  %1686 = vmatprep.subr.mxu0 0.0
  %1687 = vmatpush1.msra.mxu0 0.0
  %1688 = vmatprep.subr.mxu0 0.0
  %1689 = vmatpush1.msra.mxu0 0.0
  %1690 = vmatprep.subr.mxu0 0.0
  %1691 = vmatpush1.msra.mxu0 0.0
  %1692 = vmatprep.subr.mxu0 0.0
  %1693 = vmatpush1.msra.mxu0 0.0
  %1694 = vmatprep.subr.mxu0 0.0
  %1695 = vmatpush1.msra.mxu0 0.0
  %1696 = vmatprep.subr.mxu0 0.0
  %1697 = vmatpush1.msra.mxu0 0.0
  %1698 = vmatprep.subr.mxu0 0.0
  %1699 = vmatpush1.msra.mxu0 0.0
  %1700 = vmatprep.subr.mxu0 0.0
  %1701 = vmatpush1.msra.mxu0 0.0
  %1702 = vmatprep.subr.mxu0 0.0
  %1703 = vmatpush1.msra.mxu0 0.0
  %1704 = vmatprep.subr.mxu0 0.0
  %1705 = vmatpush1.msra.mxu0 0.0
  %1706 = vmatprep.subr.mxu0 0.0
  %1707 = vmatpush1.msra.mxu0 0.0
  %1708 = vmatprep.subr.mxu0 0.0
  %1709 = vmatpush1.msra.mxu0 0.0
  %1710 = vmatprep.subr.mxu0 0.0
  %1711 = vmatpush1.msra.mxu0 0.0
  %1712 = vmatprep.subr.mxu0 0.0
  %1713 = vmatpush1.msra.mxu0 0.0
  %1714 = vmatprep.mubr.f32.mxu0 0.0
  %1715 = vmatmul.mubr.f32.gmra.mrb[0].mxu0 %v1648
  %v1716 = vpop.f32.mrb[0].mxu0
  %v1717 = vadd.f32 0.0, %v1716
  %v1718 = vpop.f32.mrb[0].mxu0
  %1719 = vdwg.mxu0
  %v1720 = vadd.f32 %v1142, %v1717
  %v1721 = vmul.f32 %v1720, 0.5
  %v1722 = vsel %vm38, %v1720, %v1721
  %v1723 = vtanh.pop %v1722
  %v1724 = vmul.f32 %v1723, 0.5
  %v1725 = vadd.f32 %v1724, 0.5
  %v1726 = vsel %vm38, %v1723, %v1725
  %v1727 = vmul.f32 %v1726, %v1638
  %1729 = vrot.lane.b32.xlu0 %v1726, 64
  %v1730 = vpop.permute.xlu0 %1729
  %v1732 = vmul.f32 %v1726, %v1730
  %1734 = vrot.lane.b32.xlu0 %v1732, 32
  %v1735 = vpop.permute.xlu0 %1734
  %v1737 = vadd.f32 %v1727, %v1735
  %v1738 = vtanh.pop %v1737
  %1740 = vrot.lane.b32.xlu0 %v1738, 64
  %v1741 = vpop.permute.xlu0 %1740
  %v1743 = vmul.f32 %v1726, %v1741
  %1745 = vrot.lane.b32.xlu0 %v1743, 32
  %v1746 = vpop.permute.xlu0 %1745
  %v1747 = vsel %vm193, %v1746, 0
  %1749 = vmatprep.subr.mxu0 0.0
  %1750 = vmatpush1.msra.mxu0 %v1007
  %1751 = vmatprep.subr.mxu0 0.0
  %1752 = vmatpush1.msra.mxu0 %v1008
  %1753 = vmatprep.subr.mxu0 0.0
  %1754 = vmatpush1.msra.mxu0 %v1009
  %1755 = vmatprep.subr.mxu0 0.0
  %1756 = vmatpush1.msra.mxu0 %v1010
  %1757 = vmatprep.subr.mxu0 0.0
  %1758 = vmatpush1.msra.mxu0 0.0
  %1759 = vmatprep.subr.mxu0 0.0
  %1760 = vmatpush1.msra.mxu0 0.0
  %1761 = vmatprep.subr.mxu0 0.0
  %1762 = vmatpush1.msra.mxu0 0.0
  %1763 = vmatprep.subr.mxu0 0.0
  %1764 = vmatpush1.msra.mxu0 0.0
  %1765 = vmatprep.subr.mxu0 0.0
  %1766 = vmatpush1.msra.mxu0 0.0
  %1767 = vmatprep.subr.mxu0 0.0
  %1768 = vmatpush1.msra.mxu0 0.0
  %1769 = vmatprep.subr.mxu0 0.0
  %1770 = vmatpush1.msra.mxu0 0.0
  %1771 = vmatprep.subr.mxu0 0.0
  %1772 = vmatpush1.msra.mxu0 0.0
  %1773 = vmatprep.subr.mxu0 0.0
  %1774 = vmatpush1.msra.mxu0 0.0
  %1775 = vmatprep.subr.mxu0 0.0
  %1776 = vmatpush1.msra.mxu0 0.0
  %1777 = vmatprep.subr.mxu0 0.0
  %1778 = vmatpush1.msra.mxu0 0.0
  %1779 = vmatprep.subr.mxu0 0.0
  %1780 = vmatpush1.msra.mxu0 0.0
  %1781 = vmatprep.subr.mxu0 0.0
  %1782 = vmatpush1.msra.mxu0 0.0
  %1783 = vmatprep.subr.mxu0 0.0
  %1784 = vmatpush1.msra.mxu0 0.0
  %1785 = vmatprep.subr.mxu0 0.0
  %1786 = vmatpush1.msra.mxu0 0.0
  %1787 = vmatprep.subr.mxu0 0.0
  %1788 = vmatpush1.msra.mxu0 0.0
  %1789 = vmatprep.subr.mxu0 0.0
  %1790 = vmatpush1.msra.mxu0 0.0
  %1791 = vmatprep.subr.mxu0 0.0
  %1792 = vmatpush1.msra.mxu0 0.0
  %1793 = vmatprep.subr.mxu0 0.0
  %1794 = vmatpush1.msra.mxu0 0.0
  %1795 = vmatprep.subr.mxu0 0.0
  %1796 = vmatpush1.msra.mxu0 0.0
  %1797 = vmatprep.subr.mxu0 0.0
  %1798 = vmatpush1.msra.mxu0 0.0
  %1799 = vmatprep.subr.mxu0 0.0
  %1800 = vmatpush1.msra.mxu0 0.0
  %1801 = vmatprep.subr.mxu0 0.0
  %1802 = vmatpush1.msra.mxu0 0.0
  %1803 = vmatprep.subr.mxu0 0.0
  %1804 = vmatpush1.msra.mxu0 0.0
  %1805 = vmatprep.subr.mxu0 0.0
  %1806 = vmatpush1.msra.mxu0 0.0
  %1807 = vmatprep.subr.mxu0 0.0
  %1808 = vmatpush1.msra.mxu0 0.0
  %1809 = vmatprep.subr.mxu0 0.0
  %1810 = vmatpush1.msra.mxu0 0.0
  %1811 = vmatprep.subr.mxu0 0.0
  %1812 = vmatpush1.msra.mxu0 0.0
  %1813 = vmatprep.mubr.f32.mxu0 0.0
  %1814 = vmatmul.mubr.f32.gmra.mrb[0].mxu0 %v1747
  %v1815 = vpop.f32.mrb[0].mxu0
  %v1816 = vadd.f32 0.0, %v1815
  %v1817 = vpop.f32.mrb[0].mxu0
  %1818 = vdwg.mxu0
  %v1819 = vadd.f32 %v1147, %v1816
  %v1820 = vmul.f32 %v1819, 0.5
  %v1821 = vsel %vm38, %v1819, %v1820
  %v1822 = vtanh.pop %v1821
  %v1823 = vmul.f32 %v1822, 0.5
  %v1824 = vadd.f32 %v1823, 0.5
  %v1825 = vsel %vm38, %v1822, %v1824
  %v1826 = vmul.f32 %v1825, %v1737
  %1828 = vrot.lane.b32.xlu0 %v1825, 64
  %v1829 = vpop.permute.xlu0 %1828
  %v1831 = vmul.f32 %v1825, %v1829
  %1833 = vrot.lane.b32.xlu0 %v1831, 32
  %v1834 = vpop.permute.xlu0 %1833
  %v1836 = vadd.f32 %v1826, %v1834
  %v1837 = vtanh.pop %v1836
  %1839 = vrot.lane.b32.xlu0 %v1837, 64
  %v1840 = vpop.permute.xlu0 %1839
  %v1842 = vmul.f32 %v1825, %v1840
  %1844 = vrot.lane.b32.xlu0 %v1842, 32
  %v1845 = vpop.permute.xlu0 %1844
  %v1846 = vsel %vm193, %v1845, 0
  %1848 = vmatprep.subr.mxu0 0.0
  %1849 = vmatpush1.msra.mxu0 %v1007
  %1850 = vmatprep.subr.mxu0 0.0
  %1851 = vmatpush1.msra.mxu0 %v1008
  %1852 = vmatprep.subr.mxu0 0.0
  %1853 = vmatpush1.msra.mxu0 %v1009
  %1854 = vmatprep.subr.mxu0 0.0
  %1855 = vmatpush1.msra.mxu0 %v1010
  %1856 = vmatprep.subr.mxu0 0.0
  %1857 = vmatpush1.msra.mxu0 0.0
  %1858 = vmatprep.subr.mxu0 0.0
  %1859 = vmatpush1.msra.mxu0 0.0
  %1860 = vmatprep.subr.mxu0 0.0
  %1861 = vmatpush1.msra.mxu0 0.0
  %1862 = vmatprep.subr.mxu0 0.0
  %1863 = vmatpush1.msra.mxu0 0.0
  %1864 = vmatprep.subr.mxu0 0.0
  %1865 = vmatpush1.msra.mxu0 0.0
  %1866 = vmatprep.subr.mxu0 0.0
  %1867 = vmatpush1.msra.mxu0 0.0
  %1868 = vmatprep.subr.mxu0 0.0
  %1869 = vmatpush1.msra.mxu0 0.0
  %1870 = vmatprep.subr.mxu0 0.0
  %1871 = vmatpush1.msra.mxu0 0.0
  %1872 = vmatprep.subr.mxu0 0.0
  %1873 = vmatpush1.msra.mxu0 0.0
  %1874 = vmatprep.subr.mxu0 0.0
  %1875 = vmatpush1.msra.mxu0 0.0
  %1876 = vmatprep.subr.mxu0 0.0
  %1877 = vmatpush1.msra.mxu0 0.0
  %1878 = vmatprep.subr.mxu0 0.0
  %1879 = vmatpush1.msra.mxu0 0.0
  %1880 = vmatprep.subr.mxu0 0.0
  %1881 = vmatpush1.msra.mxu0 0.0
  %1882 = vmatprep.subr.mxu0 0.0
  %1883 = vmatpush1.msra.mxu0 0.0
  %1884 = vmatprep.subr.mxu0 0.0
  %1885 = vmatpush1.msra.mxu0 0.0
  %1886 = vmatprep.subr.mxu0 0.0
  %1887 = vmatpush1.msra.mxu0 0.0
  %1888 = vmatprep.subr.mxu0 0.0
  %1889 = vmatpush1.msra.mxu0 0.0
  %1890 = vmatprep.subr.mxu0 0.0
  %1891 = vmatpush1.msra.mxu0 0.0
  %1892 = vmatprep.subr.mxu0 0.0
  %1893 = vmatpush1.msra.mxu0 0.0
  %1894 = vmatprep.subr.mxu0 0.0
  %1895 = vmatpush1.msra.mxu0 0.0
  %1896 = vmatprep.subr.mxu0 0.0
  %1897 = vmatpush1.msra.mxu0 0.0
  %1898 = vmatprep.subr.mxu0 0.0
  %1899 = vmatpush1.msra.mxu0 0.0
  %1900 = vmatprep.subr.mxu0 0.0
  %1901 = vmatpush1.msra.mxu0 0.0
  %1902 = vmatprep.subr.mxu0 0.0
  %1903 = vmatpush1.msra.mxu0 0.0
  %1904 = vmatprep.subr.mxu0 0.0
  %1905 = vmatpush1.msra.mxu0 0.0
  %1906 = vmatprep.subr.mxu0 0.0
  %1907 = vmatpush1.msra.mxu0 0.0
  %1908 = vmatprep.subr.mxu0 0.0
  %1909 = vmatpush1.msra.mxu0 0.0
  %1910 = vmatprep.subr.mxu0 0.0
  %1911 = vmatpush1.msra.mxu0 0.0
  %1912 = vmatprep.mubr.f32.mxu0 0.0
  %1913 = vmatmul.mubr.f32.gmra.mrb[0].mxu0 %v1846
  %v1914 = vpop.f32.mrb[0].mxu0
  %v1915 = vadd.f32 0.0, %v1914
  %v1916 = vpop.f32.mrb[0].mxu0
  %1917 = vdwg.mxu0
  %v1918 = vadd.f32 %v1152, %v1915
  %v1919 = vmul.f32 %v1918, 0.5
  %v1920 = vsel %vm38, %v1918, %v1919
  %v1921 = vtanh.pop %v1920
  %v1922 = vmul.f32 %v1921, 0.5
  %v1923 = vadd.f32 %v1922, 0.5
  %v1924 = vsel %vm38, %v1921, %v1923
  %v1925 = vmul.f32 %v1924, %v1836
  %1927 = vrot.lane.b32.xlu0 %v1924, 64
  %v1928 = vpop.permute.xlu0 %1927
  %v1930 = vmul.f32 %v1924, %v1928
  %1932 = vrot.lane.b32.xlu0 %v1930, 32
  %v1933 = vpop.permute.xlu0 %1932
  %v1935 = vadd.f32 %v1925, %v1933
  %v1936 = vtanh.pop %v1935
  %1938 = vrot.lane.b32.xlu0 %v1936, 64
  %v1939 = vpop.permute.xlu0 %1938
  %v1941 = vmul.f32 %v1924, %v1939
  %v1942 = vld [vmem:[%s7] sm:$0x1]
  %v1944 = vlaneseq
  %v1945 = vshrl.u32 %v1944, 7
  %v1946 = vsub.s32 0, %v1945
  %v1947 = vrot.slane %v1942, %v1946
  %1948 = vrot.lane.b32.xlu0 %v1947, 96
  %v1949 = vpop.permute.xlu0 %1948
  %v1951 = vmul.f32 %v1941, %v1949
  %1953 = vrot.lane.b32.xlu0 %v1951, 32
  %v1954 = vpop.permute.xlu0 %1953
  %v1956 = vsel %vm193, %v1954, 0.0
  %1957 = vadd.xlane.f32.xlu0 %v1956
  %v1958 = vpop.xlane.xlu0 %1957
  %v1959 = vld [vmem:[#allocation3] sm:$0x1]
  %v1961 = vlaneseq
  %v1962 = vshrl.u32 %v1961, 7
  %v1963 = vsub.s32 0, %v1962
  %v1964 = vrot.slane %v1959, %v1963
  %v1966 = vadd.f32 %v1958, %v1964
  %1968 = vset.pattern.permute.xlu0 0
  %1969 = vperm.xlu0 %1968, %v1966
  %v1970 = vpop.permute.xlu0 %1969
  %1972 = vst [vmem:[%s9] sm:$0xff] %v1970
  // Predicated region
  $region38: #{lstm_model_forward.1} parent=0 // pred_check
    _
  $region39: #{lstm_model_forward.1} parent=0 // pred_check_branch
    %1974 = sbr.rel (0) target = $region41
  $region40: #{lstm_model_forward.1} parent=0 // pred_region
    _
  $region41: #{lstm_model_forward.1} parent=0 // pred_fallthru
    _
  // Predicated region
  $region42: #{lstm_model_forward.1} parent=0 // pred_check
    _
  $region43: #{lstm_model_forward.1} parent=0 // pred_check_branch
    %1976 = sbr.rel (0) target = $region45
  $region44: #{lstm_model_forward.1} parent=0 // pred_region
    _
  $region45: #{lstm_model_forward.1} parent=0 // pred_fallthru
    _

</llo_original>
